<compile_context>
chip_gen: v6e
topology: v6e:2x2x1
jax: 0.10.0
libtpu: 0.0.40
codegen_flags: <defaults>
</compile_context>

<pallas_src>
import functools

import numpy as np
import jax
import jax.numpy as jnp
from jax.experimental import pallas as pl
from jax.experimental.pallas import tpu as pltpu


# -------------------------- generation-aware tuning --------------------------
def _tpu_generation_params():
    """Returns (vmem_limit_bytes, n_core_split) for the local TPU generation.

    v5e / v6e: 128 MiB VMEM per TensorCore, 1 TC/chip -> large limit, no split.
    v7x      :  64 MiB VMEM per TensorCore, 2 TC/chip -> smaller limit, split
               the mask stream over a leading "parallel" grid axis so both
               TensorCores get work.
    Falls back to conservative values if the hardware query is unavailable.
    """
    vmem_limit = 48 * 1024 * 1024
    n_core_split = 1
    try:
        vmem_cap = int(pltpu.get_tpu_info().vmem_capacity_bytes)
        vmem_limit = min(100 * 1024 * 1024, (vmem_cap * 3) // 4)
        if vmem_cap < 96 * 1024 * 1024:          # v7x-class (64 MiB per TC)
            n_core_split = 2
    except Exception:
        pass
    return vmem_limit, n_core_split


# ----------------------------- Pallas kernel ---------------------------------
def _rise_accum_kernel(masks_ref, weff_ref, b_ref, sal_ref):
    """Accumulates probs^T @ masks for one mask tile into the resident output.

    masks_ref: [N_TILE, HW]   bf16  (streamed over grid axis 1)
    weff_ref : [HW, K_pad]    bf16  (resident; the image is folded into W)
    b_ref    : [1, K_pad]     f32   (padded classes hold -1e30)
    sal_ref  : [K_pad, HW]    f32   (resident per-core partial accumulator)
    """
    i = pl.program_id(1)

    @pl.when(i == 0)
    def _init():
        sal_ref[...] = jnp.zeros_like(sal_ref)

    masks = masks_ref[...]                                        # [Nt, HW] bf16

    # logits = masks @ W_eff + b   (bf16 MXU, f32 accumulate)
    logits = jnp.dot(masks, weff_ref[...],
                     preferred_element_type=jnp.float32)          # [Nt, K_pad]
    logits = logits + b_ref[...]

    # softmax over classes (padded classes have logit ~ -1e30 -> prob ~ 0)
    m = jnp.max(logits, axis=1, keepdims=True)
    e = jnp.exp(logits - m)
    denom = jnp.sum(e, axis=1, keepdims=True)
    probs = e * pl.reciprocal(denom, approx=True)                 # [Nt, K_pad]

    # saliency contribution: probs^T @ masks (contract the N_TILE axis).
    # TODO(synk): confirm in the bundle dump that Mosaic transposes the small
    # probs tile ([Nt, K_pad]) and not the masks tile; if not, switch to an
    # [HW, K_pad] accumulator with one finalize-time transpose.
    sal_ref[...] += jax.lax.dot_general(
        probs.astype(jnp.bfloat16), masks,
        (((0,), (0,)), ((), ())),
        preferred_element_type=jnp.float32)                       # [K_pad, HW]


def _run_pallas(masks_bf16, W_eff_bf16, b_p, *, n_core_split, tiles_per_core,
                n_tile, HW, K_pad, vmem_limit, single_buffer_resident):
    resident_kw = {}
    if single_buffer_resident:
        # Constant-index operands are never re-fetched; don't double-buffer.
        resident_kw = dict(pipeline_mode=pl.Buffered(1))

    in_specs = [
        pl.BlockSpec((n_tile, HW),
                     lambda c, i: (c * tiles_per_core + i, 0)),   # streamed masks
        pl.BlockSpec((HW, K_pad), lambda c, i: (0, 0), **resident_kw),
        pl.BlockSpec((1, K_pad), lambda c, i: (0, 0), **resident_kw),
    ]
    out_specs = pl.BlockSpec((None, K_pad, HW), lambda c, i: (c, 0, 0))

    return pl.pallas_call(
        _rise_accum_kernel,
        out_shape=jax.ShapeDtypeStruct((n_core_split, K_pad, HW), jnp.float32),
        grid=(n_core_split, tiles_per_core),
        in_specs=in_specs,
        out_specs=out_specs,
        compiler_params=pltpu.CompilerParams(
            dimension_semantics=("parallel", "arbitrary"),  # cores x N-reduction
            vmem_limit_bytes=vmem_limit),
    )(masks_bf16, W_eff_bf16, b_p)


def rise_saliency_pallas(x, masks, W, b, p1, *, n_tile=None):
    """x: [1, C, H, W]; masks: [N, 1, H, W]; W: [C*H*W, K]; b: [K]."""
    N = masks.shape[0]
    _, C, H, Wd = x.shape
    HW = H * Wd
    K = W.shape[1]

    vmem_limit, n_core_split = _tpu_generation_params()

    # ---- algebraic fusion of the image into the weights (done once) --------
    x_flat = x.reshape(C, HW).astype(jnp.float32)
    W3 = W.reshape(C, HW, K).astype(jnp.float32)
    W_eff = jnp.einsum('ch,chk->hk', x_flat, W3)                  # [HW, K]

    # ---- pad classes to a full 128-lane width -------------------------------
    K_pad = max(((K + 127) // 128) * 128, 128)
    W_eff_p = jnp.zeros((HW, K_pad), jnp.float32).at[:, :K].set(W_eff)
    b_p = jnp.full((1, K_pad), -1e30, jnp.float32)
    b_p = b_p.at[0, :K].set(b.astype(jnp.float32))

    # ---- mask tiling: full MXU-depth tiles ----------------------------------
    # n_tile is both the MXU row count of the first matmul and the contraction
    # depth of the second; floor at one full MXU tile (256), allow 512 for
    # large N.  Zero-padded mask rows contribute nothing to the accumulation.
    if n_tile is None:
        n_tile = 512 if N > 512 else 256
    chunk = n_core_split * n_tile
    N_pad = ((N + chunk - 1) // chunk) * chunk
    tiles_per_core = N_pad // chunk

    masks_flat = jnp.zeros((N_pad, HW), jnp.float32)
    masks_flat = masks_flat.at[:N].set(masks.reshape(N, HW).astype(jnp.float32))
    masks_bf16 = masks_flat.astype(jnp.bfloat16)
    W_eff_bf16 = W_eff_p.astype(jnp.bfloat16)

    run = functools.partial(
        _run_pallas, n_core_split=n_core_split, tiles_per_core=tiles_per_core,
        n_tile=n_tile, HW=HW, K_pad=K_pad, vmem_limit=vmem_limit)
    try:
        sal_parts = run(masks_bf16, W_eff_bf16, b_p, single_buffer_resident=True)
        sal_parts = jax.block_until_ready(sal_parts)
    except Exception:
        # Some jax versions reject Buffered(1) on pallas_call BlockSpecs; fall
        # back to default double buffering of the resident operands.
        sal_parts = run(masks_bf16, W_eff_bf16, b_p, single_buffer_resident=False)

    # ---- finalize in the wrapper (sum per-core partials, normalize) --------
    sal = jnp.sum(sal_parts, axis=0)[:K] / (N * p1)               # [K, HW]
    mn = jnp.min(sal, axis=1, keepdims=True)
    sal = sal - mn
    mx = jnp.max(sal, axis=1, keepdims=True)
    sal = sal / jnp.where(mx > 0, mx, 1.0)                        # NaN guard
    return sal.reshape(K, H, Wd)


# ------------------------- glue: RISE mask generation ------------------------
def generate_masks(key, n_masks, p1, input_size, initial_mask_size):
    # mirrors RISE.generate_masks (threshold randn < p1, bilinear upsample,
    # random crop).  Setup glue, done in plain JAX (not a kernel).
    Ch = int(np.ceil(input_size[0] / initial_mask_size[0]))
    Cw = int(np.ceil(input_size[1] / initial_mask_size[1]))
    resize_h = (initial_mask_size[0] + 1) * Ch
    resize_w = (initial_mask_size[1] + 1) * Cw
    # TODO(synk): jax.image.resize 'bilinear' approximates
    # F.interpolate(mode='bilinear', align_corners=False) edge handling.
    masks = []
    for _ in range(n_masks):
        key, k1, k2 = jax.random.split(key, 3)
        binary = (jax.random.normal(k1, initial_mask_size) < p1).astype(jnp.float32)
        big = jax.image.resize(binary, (resize_h, resize_w), method="bilinear")
        ij = jax.random.randint(k2, (2,), 0, jnp.array([Ch, Cw]))
        i, j = int(ij[0]), int(ij[1])
        masks.append(big[i:i + input_size[0], j:j + input_size[1]])
    return jnp.stack(masks)[:, None, :, :]  # [N, 1, H, W]


# ----------------------------- pure-JAX reference ----------------------------
def rise_saliency_ref(x, masks, W, b, p1):
    N = masks.shape[0]
    _, C, H, Wd = x.shape
    masked = masks * x                               # [N, C, H, W]
    flat = masked.reshape(N, -1)
    logits = flat @ W + b
    probs = jax.nn.softmax(logits, axis=1)
    K = probs.shape[1]
    sal = probs.T @ masks.reshape(N, -1)
    sal = sal.reshape(K, H, Wd) / (N * p1)
    mn = sal.reshape(K, -1).min(axis=1)
    sal = sal - mn[:, None, None]
    mx = sal.reshape(K, -1).max(axis=1)
    return sal / mx[:, None, None]


if __name__ == "__main__":
    # small, deterministic shapes consistent with the module
    n_masks = 8
    p1 = 0.1
    input_size = (16, 16)
    initial_mask_size = (4, 4)
    C = 4              # image channels
    n_classes = 8      # classes of the synthetic linear model

    key = jax.random.PRNGKey(0)
    kx, km, kw, kb = jax.random.split(key, 4)

    x = jax.random.normal(kx, (1, C, *input_size), dtype=jnp.float32)
    masks = generate_masks(km, n_masks, p1, input_size, initial_mask_size)

    in_features = C * input_size[0] * input_size[1]
    W = 0.02 * jax.random.normal(kw, (in_features, n_classes), dtype=jnp.float32)
    b = 0.1 * jax.random.normal(kb, (n_classes,), dtype=jnp.float32)

    sal = rise_saliency_pallas(x, masks, W, b, p1)
    sal = jax.block_until_ready(sal)

    ref = rise_saliency_ref(x, masks, W, b, p1)
    # bf16 matmul operands + approx softmax reciprocal -> looser tolerance
    np.testing.assert_allclose(np.asarray(sal), np.asarray(ref),
                               rtol=3e-2, atol=3e-2)

    print("KERNEL_OK")
</pallas_src>

<mosaic_0001>
module attributes {stable_mosaic.version = 11 : i64} {
  func.func @_rise_accum_kernel(%arg0: i32, %arg1: i32, %arg2: memref<256x256xbf16, #tpu.memory_space<vmem>>, %arg3: memref<256x128xbf16, #tpu.memory_space<vmem>>, %arg4: memref<1x128xf32, #tpu.memory_space<vmem>>, %arg5: memref<1x128x256xf32, #tpu.memory_space<vmem>>) attributes {dimension_semantics = [#tpu.dimension_semantics<parallel>, #tpu.dimension_semantics<arbitrary>], iteration_bounds = array<i64: 1, 1>, scalar_prefetch = 0 : i64, scratch_operands = 0 : i64, tpu.core_type = #tpu.core_type<tc>, window_params = [{transform_indices = @transform_0, window_bounds = array<i64: 256, 256>}, {pipeline_mode = #tpu.pipeline_mode<synchronous>, transform_indices = @transform_1, window_bounds = array<i64: 256, 128>}, {pipeline_mode = #tpu.pipeline_mode<synchronous>, transform_indices = @transform_2, window_bounds = array<i64: 1, 128>}, {transform_indices = @transform_3, window_bounds = array<i64: 1, 128, 256>}]} {
    %c0_i32 = arith.constant 0 : i32
    %0 = arith.cmpi eq, %arg1, %c0_i32 : i32
    %1 = arith.extui %0 : i1 to i32
    %c0_i32_0 = arith.constant 0 : i32
    %2 = arith.cmpi ne, %1, %c0_i32_0 : i32
    scf.if %2 {
      %cst_15 = arith.constant 0.000000e+00 : f32
      %27 = vector.broadcast %cst_15 : f32 to vector<128x256xf32>
      %c0_16 = arith.constant 0 : index
      %c0_17 = arith.constant 0 : index
      %c0_18 = arith.constant 0 : index
      %28 = vector.load %arg5[%c0_16, %c0_17, %c0_18] : memref<1x128x256xf32, #tpu.memory_space<vmem>>, vector<1x128x256xf32>
      %29 = vector.shape_cast %28 : vector<1x128x256xf32> to vector<128x256xf32>
      %30 = vector.shape_cast %27 : vector<128x256xf32> to vector<1x128x256xf32>
      tpu.vector_store %arg5[%c0_16, %c0_17, %c0_18], %30 {strides = array<i32>} : memref<1x128x256xf32, #tpu.memory_space<vmem>>, vector<1x128x256xf32>,
    } else {
    }
    %c0 = arith.constant 0 : index
    %c0_1 = arith.constant 0 : index
    %3 = vector.load %arg2[%c0, %c0_1] : memref<256x256xbf16, #tpu.memory_space<vmem>>, vector<256x256xbf16>
    %c0_2 = arith.constant 0 : index
    %c0_3 = arith.constant 0 : index
    %4 = vector.load %arg3[%c0_2, %c0_3] : memref<256x128xbf16, #tpu.memory_space<vmem>>, vector<256x128xbf16>
    %cst = arith.constant dense<0.000000e+00> : vector<256x128xf32>
    %5 = tpu.matmul %3, %4, %cst {dimension_numbers = #tpu.dot_dimension_numbers<[1], [0], [0], [1], [0, 0, 1, 1], [], []>} : vector<256x256xbf16>, vector<256x128xbf16>, vector<256x128xf32> -> vector<256x128xf32>
    %c0_4 = arith.constant 0 : index
    %c0_5 = arith.constant 0 : index
    %6 = vector.load %arg4[%c0_4, %c0_5] : memref<1x128xf32, #tpu.memory_space<vmem>>, vector<1x128xf32>
    %7 = vector.broadcast %6 : vector<1x128xf32> to vector<256x128xf32>
    %8 = arith.addf %5, %7 : vector<256x128xf32>
    %cst_6 = arith.constant dense<0xFF800000> : vector<256xf32>
    %9 = vector.multi_reduction <maximumf>, %8, %cst_6 [1] : vector<256x128xf32> to vector<256xf32>
    %10 = vector.shape_cast %9 : vector<256xf32> to vector<256x1xf32>
    %11 = vector.broadcast %10 : vector<256x1xf32> to vector<256x128xf32>
    %12 = arith.subf %8, %11 : vector<256x128xf32>
    %13 = math.exp %12 : vector<256x128xf32>
    %cst_7 = arith.constant dense<0.000000e+00> : vector<256xf32>
    %14 = vector.multi_reduction <add>, %13, %cst_7 [1] : vector<256x128xf32> to vector<256xf32>
    %15 = vector.shape_cast %14 : vector<256xf32> to vector<256x1xf32>
    %16 = tpu.reciprocal %15 {approx = true} : vector<256x1xf32> -> vector<256x1xf32>
    %17 = vector.broadcast %16 : vector<256x1xf32> to vector<256x128xf32>
    %18 = arith.mulf %13, %17 : vector<256x128xf32>
    %c0_8 = arith.constant 0 : index
    %c0_9 = arith.constant 0 : index
    %c0_10 = arith.constant 0 : index
    %19 = vector.load %arg5[%c0_8, %c0_9, %c0_10] : memref<1x128x256xf32, #tpu.memory_space<vmem>>, vector<1x128x256xf32>
    %20 = vector.shape_cast %19 : vector<1x128x256xf32> to vector<128x256xf32>
    %21 = arith.truncf %18 : vector<256x128xf32> to vector<256x128xbf16>
    %cst_11 = arith.constant dense<0.000000e+00> : vector<128x256xf32>
    %22 = tpu.matmul %21, %3, %cst_11 {dimension_numbers = #tpu.dot_dimension_numbers<[0], [0], [1], [1], [0, 1, 1, 1], [], []>} : vector<256x128xbf16>, vector<256x256xbf16>, vector<128x256xf32> -> vector<128x256xf32>
    %23 = arith.addf %20, %22 : vector<128x256xf32>
    %c0_12 = arith.constant 0 : index
    %c0_13 = arith.constant 0 : index
    %c0_14 = arith.constant 0 : index
    %24 = vector.load %arg5[%c0_12, %c0_13, %c0_14] : memref<1x128x256xf32, #tpu.memory_space<vmem>>, vector<1x128x256xf32>
    %25 = vector.shape_cast %24 : vector<1x128x256xf32> to vector<128x256xf32>
    %26 = vector.shape_cast %23 : vector<128x256xf32> to vector<1x128x256xf32>
    tpu.vector_store %arg5[%c0_12, %c0_13, %c0_14], %26 {strides = array<i32>} : memref<1x128x256xf32, #tpu.memory_space<vmem>>, vector<1x128x256xf32>,
    return
  }
  func.func @transform_0(%arg0: i32, %arg1: i32) -> (i32, i32) {
    %c1_i32 = arith.constant 1 : i32
    %0 = arith.muli %arg0, %c1_i32 : i32
    %1 = arith.addi %0, %arg1 : i32
    %c0_i32 = arith.constant 0 : i32
    %c0_i32_0 = arith.constant 0 : i32
    return %1, %c0_i32 : i32, i32
  }
  func.func @transform_1(%arg0: i32, %arg1: i32) -> (i32, i32) {
    %c0_i32 = arith.constant 0 : i32
    %c0_i32_0 = arith.constant 0 : i32
    %c0_i32_1 = arith.constant 0 : i32
    return %c0_i32, %c0_i32_0 : i32, i32
  }
  func.func @transform_2(%arg0: i32, %arg1: i32) -> (i32, i32) {
    %c0_i32 = arith.constant 0 : i32
    %c0_i32_0 = arith.constant 0 : i32
    %c0_i32_1 = arith.constant 0 : i32
    return %c0_i32, %c0_i32_0 : i32, i32
  }
  func.func @transform_3(%arg0: i32, %arg1: i32) -> (i32, i32, i32) {
    %c0_i32 = arith.constant 0 : i32
    %c0_i32_0 = arith.constant 0 : i32
    %c0_i32_1 = arith.constant 0 : i32
    return %arg0, %c0_i32, %c0_i32_0 : i32, i32, i32
  }
}

module attributes {stable_mosaic.version = 11 : i64} {
  func.func @_rise_accum_kernel(%arg0: i32, %arg1: i32, %arg2: memref<256x256xbf16, #tpu.memory_space<vmem>>, %arg3: memref<256x128xbf16, #tpu.memory_space<vmem>>, %arg4: memref<1x128xf32, #tpu.memory_space<vmem>>, %arg5: memref<1x128x256xf32, #tpu.memory_space<vmem>>) attributes {dimension_semantics = [#tpu.dimension_semantics<parallel>, #tpu.dimension_semantics<arbitrary>], iteration_bounds = array<i64: 1, 1>, scalar_prefetch = 0 : i64, scratch_operands = 0 : i64, tpu.core_type = #tpu.core_type<tc>, window_params = [{transform_indices = @transform_0, window_bounds = array<i64: 256, 256>}, {pipeline_mode = #tpu.pipeline_mode<synchronous>, transform_indices = @transform_1, window_bounds = array<i64: 256, 128>}, {pipeline_mode = #tpu.pipeline_mode<synchronous>, transform_indices = @transform_2, window_bounds = array<i64: 1, 128>}, {transform_indices = @transform_3, window_bounds = array<i64: 1, 128, 256>}]} {
    %c0_i32 = arith.constant 0 : i32
    %0 = arith.cmpi eq, %arg1, %c0_i32 : i32
    %1 = arith.extui %0 : i1 to i32
    %c0_i32_0 = arith.constant 0 : i32
    %2 = arith.cmpi ne, %1, %c0_i32_0 : i32
    scf.if %2 {
      %cst_15 = arith.constant 0.000000e+00 : f32
      %27 = vector.broadcast %cst_15 : f32 to vector<128x256xf32>
      %c0_16 = arith.constant 0 : index
      %c0_17 = arith.constant 0 : index
      %c0_18 = arith.constant 0 : index
      %28 = vector.load %arg5[%c0_16, %c0_17, %c0_18] : memref<1x128x256xf32, #tpu.memory_space<vmem>>, vector<1x128x256xf32>
      %29 = vector.shape_cast %28 : vector<1x128x256xf32> to vector<128x256xf32>
      %30 = vector.shape_cast %27 : vector<128x256xf32> to vector<1x128x256xf32>
      tpu.vector_store %arg5[%c0_16, %c0_17, %c0_18], %30 {strides = array<i32>} : memref<1x128x256xf32, #tpu.memory_space<vmem>>, vector<1x128x256xf32>,
    } else {
    }
    %c0 = arith.constant 0 : index
    %c0_1 = arith.constant 0 : index
    %3 = vector.load %arg2[%c0, %c0_1] : memref<256x256xbf16, #tpu.memory_space<vmem>>, vector<256x256xbf16>
    %c0_2 = arith.constant 0 : index
    %c0_3 = arith.constant 0 : index
    %4 = vector.load %arg3[%c0_2, %c0_3] : memref<256x128xbf16, #tpu.memory_space<vmem>>, vector<256x128xbf16>
    %cst = arith.constant dense<0.000000e+00> : vector<256x128xf32>
    %5 = tpu.matmul %3, %4, %cst {dimension_numbers = #tpu.dot_dimension_numbers<[1], [0], [0], [1], [0, 0, 1, 1], [], []>} : vector<256x256xbf16>, vector<256x128xbf16>, vector<256x128xf32> -> vector<256x128xf32>
    %c0_4 = arith.constant 0 : index
    %c0_5 = arith.constant 0 : index
    %6 = vector.load %arg4[%c0_4, %c0_5] : memref<1x128xf32, #tpu.memory_space<vmem>>, vector<1x128xf32>
    %7 = vector.broadcast %6 : vector<1x128xf32> to vector<256x128xf32>
    %8 = arith.addf %5, %7 : vector<256x128xf32>
    %cst_6 = arith.constant dense<0xFF800000> : vector<256xf32>
    %9 = vector.multi_reduction <maximumf>, %8, %cst_6 [1] : vector<256x128xf32> to vector<256xf32>
    %10 = vector.shape_cast %9 : vector<256xf32> to vector<256x1xf32>
    %11 = vector.broadcast %10 : vector<256x1xf32> to vector<256x128xf32>
    %12 = arith.subf %8, %11 : vector<256x128xf32>
    %13 = math.exp %12 : vector<256x128xf32>
    %cst_7 = arith.constant dense<0.000000e+00> : vector<256xf32>
    %14 = vector.multi_reduction <add>, %13, %cst_7 [1] : vector<256x128xf32> to vector<256xf32>
    %15 = vector.shape_cast %14 : vector<256xf32> to vector<256x1xf32>
    %16 = tpu.reciprocal %15 {approx = true} : vector<256x1xf32> -> vector<256x1xf32>
    %17 = vector.broadcast %16 : vector<256x1xf32> to vector<256x128xf32>
    %18 = arith.mulf %13, %17 : vector<256x128xf32>
    %c0_8 = arith.constant 0 : index
    %c0_9 = arith.constant 0 : index
    %c0_10 = arith.constant 0 : index
    %19 = vector.load %arg5[%c0_8, %c0_9, %c0_10] : memref<1x128x256xf32, #tpu.memory_space<vmem>>, vector<1x128x256xf32>
    %20 = vector.shape_cast %19 : vector<1x128x256xf32> to vector<128x256xf32>
    %21 = arith.truncf %18 : vector<256x128xf32> to vector<256x128xbf16>
    %cst_11 = arith.constant dense<0.000000e+00> : vector<128x256xf32>
    %22 = tpu.matmul %21, %3, %cst_11 {dimension_numbers = #tpu.dot_dimension_numbers<[0], [0], [1], [1], [0, 1, 1, 1], [], []>} : vector<256x128xbf16>, vector<256x256xbf16>, vector<128x256xf32> -> vector<128x256xf32>
    %23 = arith.addf %20, %22 : vector<128x256xf32>
    %c0_12 = arith.constant 0 : index
    %c0_13 = arith.constant 0 : index
    %c0_14 = arith.constant 0 : index
    %24 = vector.load %arg5[%c0_12, %c0_13, %c0_14] : memref<1x128x256xf32, #tpu.memory_space<vmem>>, vector<1x128x256xf32>
    %25 = vector.shape_cast %24 : vector<1x128x256xf32> to vector<128x256xf32>
    %26 = vector.shape_cast %23 : vector<128x256xf32> to vector<1x128x256xf32>
    tpu.vector_store %arg5[%c0_12, %c0_13, %c0_14], %26 {strides = array<i32>} : memref<1x128x256xf32, #tpu.memory_space<vmem>>, vector<1x128x256xf32>,
    return
  }
  func.func @transform_0(%arg0: i32, %arg1: i32) -> (i32, i32) {
    %c1_i32 = arith.constant 1 : i32
    %0 = arith.muli %arg0, %c1_i32 : i32
    %1 = arith.addi %0, %arg1 : i32
    %c0_i32 = arith.constant 0 : i32
    %c0_i32_0 = arith.constant 0 : i32
    return %1, %c0_i32 : i32, i32
  }
  func.func @transform_1(%arg0: i32, %arg1: i32) -> (i32, i32) {
    %c0_i32 = arith.constant 0 : i32
    %c0_i32_0 = arith.constant 0 : i32
    %c0_i32_1 = arith.constant 0 : i32
    return %c0_i32, %c0_i32_0 : i32, i32
  }
  func.func @transform_2(%arg0: i32, %arg1: i32) -> (i32, i32) {
    %c0_i32 = arith.constant 0 : i32
    %c0_i32_0 = arith.constant 0 : i32
    %c0_i32_1 = arith.constant 0 : i32
    return %c0_i32, %c0_i32_0 : i32, i32
  }
  func.func @transform_3(%arg0: i32, %arg1: i32) -> (i32, i32, i32) {
    %c0_i32 = arith.constant 0 : i32
    %c0_i32_0 = arith.constant 0 : i32
    %c0_i32_1 = arith.constant 0 : i32
    return %arg0, %c0_i32, %c0_i32_0 : i32, i32, i32
  }
}

</mosaic_0001>

<llo_original>
// kernel: tpu_custom_call.1
$region0: #{tpu_custom_call.1}
  #allocation0 [shape = 'u32[]', space=smem, size = 0x4, offset = 0x4, fixed_abs, tag = 'smem constant byte address 0x4 - core index']
  #allocation1 [shape = 'u32[144,128]{1,0:T(1,128)}', space=vmem, size = 0x12000, scoped, tag = 'internal scratch']
  %s0 = inlined_call_operand.hbm [shape: bf16[256,256], index: 0, kind: input, shape index: {}]
  %s1 = inlined_call_operand.hbm [shape: bf16[256,128], index: 1, kind: input, shape index: {}]
  %s2 = inlined_call_operand.vmem [shape: f32[1,128], index: 2, kind: input, shape index: {}]
  %s3 = inlined_call_operand.hbm [shape: f32[1,128,256], index: 3, kind: output, shape index: {}]
  %s4 = sld [smem:[#allocation0]]
  $region34: #{tpu_custom_call.1} parent=0
    _
  %s6 = ssub.s32 1, %s4
  %s7 = scalar_select 0, %s6, %s4
  $region1: #{tpu_custom_call.1} parent=0
    #allocation2 [shape = 'u8[131072]{0}', space=vmem, size = 0x20000, scoped, tag = 'input window, operand 0, single buffered']
    #allocation3 [shape = 's32[1]{0}', space=sflag, size = 0x4, scoped, tag = 'scoped memory for tpu_custom_call.1']
    #allocation4 [shape = 's32[1]{0}', space=sflag, size = 0x4, scoped, tag = 'scoped memory for tpu_custom_call.1']
    #allocation5 [shape = 'u8[65536]{0}', space=vmem, size = 0x10000, scoped, tag = 'input window, operand 1, single buffered']
    #allocation6 [shape = 's32[1]{0}', space=sflag, size = 0x4, scoped, tag = 'scoped memory for tpu_custom_call.1']
    #allocation7 [shape = 'u8[131072]{0}', space=vmem, size = 0x20000, scoped, tag = 'output window, operand 0, single buffered']
    %8 = vsyncpa [#allocation3], 0
    %9 = vsyncpa [#allocation6], 0
    %10 = vsyncpa [#allocation4], 0
    // Predicated region
    $region2: #{tpu_custom_call.1} parent=1 // pred_check
      _
    $region3: #{tpu_custom_call.1} parent=1 // pred_check_branch
      %12 = sbr.rel (0) target = $region5
    $region4: #{tpu_custom_call.1} parent=1 // pred_region
      %s13 = sadd.s32 0, 0
      %s14 = smul.u32 32, %s13
      %s16 = ssub.s32 4096, 4096
      %17 = vsyncadd [#allocation3], %s16
      %s18 = smul.addr %s14, 2
      %s19 = smul.addr %s18, 64
      %s20 = scalar_lea.hbm %s0, %s19
      %s21 = sshll.u32 [#allocation2], 4
      %s22 = int_to_ptr.vmem [resolvable:$true] %s21
      %27 = dma.hbm_to_vmem [thread:$0]  %s20, 4096, %s22, [#allocation3], 128, 128, 8
    $region5: #{tpu_custom_call.1} parent=1 // pred_fallthru
      _
    // Predicated region
    $region6: #{tpu_custom_call.1} parent=1 // pred_check
      _
    $region7: #{tpu_custom_call.1} parent=1 // pred_check_branch
      %29 = sbr.rel (0) target = $region9
    $region8: #{tpu_custom_call.1} parent=1 // pred_region
      %s31 = ssub.s32 2048, 2048
      %32 = vsyncadd [#allocation6], %s31
      %s33 = sshll.u32 [#allocation5], 4
      %s34 = int_to_ptr.vmem [resolvable:$true] %s33
      %39 = dma.hbm_to_vmem [thread:$0]  %s1, 2048, %s34, [#allocation6], 64, 64, 4
    $region9: #{tpu_custom_call.1} parent=1 // pred_fallthru
      _
    // Predicated region
    $region10: #{tpu_custom_call.1} parent=1 // pred_check
      _
    $region11: #{tpu_custom_call.1} parent=1 // pred_check_branch
      %41 = sbr.rel (0) target = $region13
    $region12: #{tpu_custom_call.1} parent=1 // pred_region
      _
    $region13: #{tpu_custom_call.1} parent=1 // pred_fallthru
      _
    // Predicated region
    $region14: #{tpu_custom_call.1} parent=1 // pred_check
      _
    $region15: #{tpu_custom_call.1} parent=1 // pred_check_branch
      %43 = sbr.rel (0) target = $region17
    $region16: #{tpu_custom_call.1} parent=1 // pred_region
      %44 = dma.done [#allocation3], 4096
    $region17: #{tpu_custom_call.1} parent=1 // pred_fallthru
      _
    // Predicated region
    $region18: #{tpu_custom_call.1} parent=1 // pred_check
      _
    $region19: #{tpu_custom_call.1} parent=1 // pred_check_branch
      %46 = sbr.rel (0) target = $region21
    $region20: #{tpu_custom_call.1} parent=1 // pred_region
      %47 = dma.done [#allocation6], 2048
    $region21: #{tpu_custom_call.1} parent=1 // pred_fallthru
      _
    %s48 = sadd.s32 0, 0
    %s49 = smul.u32 32, %s48
    %p51 = scmp.eq.s32.totalorder 0, 0
    // Predicated region
    $region22: #{tpu_custom_call.1} parent=1 // pred_check
      %p52 = pneg %p51
    $region23: #{tpu_custom_call.1} parent=1 // pred_check_branch
      %54 = sbr.rel (%p52) target = $region25
    $region24: #{tpu_custom_call.1} parent=1 // pred_region
      %55 = vst [vmem:[#allocation7] sm:$0xff] 0.0
      %56 = vst [vmem:[#allocation7 + $0x8] sm:$0xff] 0.0
      %57 = vst [vmem:[#allocation7 + $0x10] sm:$0xff] 0.0
      %58 = vst [vmem:[#allocation7 + $0x18] sm:$0xff] 0.0
      %59 = vst [vmem:[#allocation7 + $0x20] sm:$0xff] 0.0
      %60 = vst [vmem:[#allocation7 + $0x28] sm:$0xff] 0.0
      %61 = vst [vmem:[#allocation7 + $0x30] sm:$0xff] 0.0
      %62 = vst [vmem:[#allocation7 + $0x38] sm:$0xff] 0.0
      %63 = vst [vmem:[#allocation7 + $0x40] sm:$0xff] 0.0
      %64 = vst [vmem:[#allocation7 + $0x48] sm:$0xff] 0.0
      %65 = vst [vmem:[#allocation7 + $0x50] sm:$0xff] 0.0
      %66 = vst [vmem:[#allocation7 + $0x58] sm:$0xff] 0.0
      %67 = vst [vmem:[#allocation7 + $0x60] sm:$0xff] 0.0
      %68 = vst [vmem:[#allocation7 + $0x68] sm:$0xff] 0.0
      %69 = vst [vmem:[#allocation7 + $0x70] sm:$0xff] 0.0
      %70 = vst [vmem:[#allocation7 + $0x78] sm:$0xff] 0.0
      %71 = vst [vmem:[#allocation7 + $0x80] sm:$0xff] 0.0
      %72 = vst [vmem:[#allocation7 + $0x88] sm:$0xff] 0.0
      %73 = vst [vmem:[#allocation7 + $0x90] sm:$0xff] 0.0
      %74 = vst [vmem:[#allocation7 + $0x98] sm:$0xff] 0.0
      %75 = vst [vmem:[#allocation7 + $0xa0] sm:$0xff] 0.0
      %76 = vst [vmem:[#allocation7 + $0xa8] sm:$0xff] 0.0
      %77 = vst [vmem:[#allocation7 + $0xb0] sm:$0xff] 0.0
      %78 = vst [vmem:[#allocation7 + $0xb8] sm:$0xff] 0.0
      %79 = vst [vmem:[#allocation7 + $0xc0] sm:$0xff] 0.0
      %80 = vst [vmem:[#allocation7 + $0xc8] sm:$0xff] 0.0
      %81 = vst [vmem:[#allocation7 + $0xd0] sm:$0xff] 0.0
      %82 = vst [vmem:[#allocation7 + $0xd8] sm:$0xff] 0.0
      %83 = vst [vmem:[#allocation7 + $0xe0] sm:$0xff] 0.0
      %84 = vst [vmem:[#allocation7 + $0xe8] sm:$0xff] 0.0
      %85 = vst [vmem:[#allocation7 + $0xf0] sm:$0xff] 0.0
      %86 = vst [vmem:[#allocation7 + $0xf8] sm:$0xff] 0.0
    $region25: #{tpu_custom_call.1} parent=1 // pred_fallthru
      _
    %v87 = vld [vmem:[#allocation2] sm:$0xff]
    %v88 = vld [vmem:[#allocation2 + $0x8] sm:$0xff]
    %v89 = vld [vmem:[#allocation2 + $0x10] sm:$0xff]
    %v90 = vld [vmem:[#allocation2 + $0x18] sm:$0xff]
    %v91 = vld [vmem:[#allocation2 + $0x20] sm:$0xff]
    %v92 = vld [vmem:[#allocation2 + $0x28] sm:$0xff]
    %v93 = vld [vmem:[#allocation2 + $0x30] sm:$0xff]
    %v94 = vld [vmem:[#allocation2 + $0x38] sm:$0xff]
    %v95 = vld [vmem:[#allocation2 + $0x40] sm:$0xff]
    %v96 = vld [vmem:[#allocation2 + $0x48] sm:$0xff]
    %v97 = vld [vmem:[#allocation2 + $0x50] sm:$0xff]
    %v98 = vld [vmem:[#allocation2 + $0x58] sm:$0xff]
    %v99 = vld [vmem:[#allocation2 + $0x60] sm:$0xff]
    %v100 = vld [vmem:[#allocation2 + $0x68] sm:$0xff]
    %v101 = vld [vmem:[#allocation2 + $0x70] sm:$0xff]
    %v102 = vld [vmem:[#allocation2 + $0x78] sm:$0xff]
    %v103 = vld [vmem:[#allocation2 + $0x80] sm:$0xff]
    %v104 = vld [vmem:[#allocation2 + $0x88] sm:$0xff]
    %v105 = vld [vmem:[#allocation2 + $0x90] sm:$0xff]
    %v106 = vld [vmem:[#allocation2 + $0x98] sm:$0xff]
    %v107 = vld [vmem:[#allocation2 + $0xa0] sm:$0xff]
    %v108 = vld [vmem:[#allocation2 + $0xa8] sm:$0xff]
    %v109 = vld [vmem:[#allocation2 + $0xb0] sm:$0xff]
    %v110 = vld [vmem:[#allocation2 + $0xb8] sm:$0xff]
    %v111 = vld [vmem:[#allocation2 + $0xc0] sm:$0xff]
    %v112 = vld [vmem:[#allocation2 + $0xc8] sm:$0xff]
    %v113 = vld [vmem:[#allocation2 + $0xd0] sm:$0xff]
    %v114 = vld [vmem:[#allocation2 + $0xd8] sm:$0xff]
    %v115 = vld [vmem:[#allocation2 + $0xe0] sm:$0xff]
    %v116 = vld [vmem:[#allocation2 + $0xe8] sm:$0xff]
    %v117 = vld [vmem:[#allocation2 + $0xf0] sm:$0xff]
    %v118 = vld [vmem:[#allocation2 + $0xf8] sm:$0xff]
    %v119 = vld [vmem:[#allocation5] sm:$0xf]
    %v120 = vld [vmem:[#allocation5 + $0x4] sm:$0xf]
    %v121 = vld [vmem:[#allocation5 + $0x8] sm:$0xf]
    %v122 = vld [vmem:[#allocation5 + $0xc] sm:$0xf]
    %v123 = vld [vmem:[#allocation5 + $0x10] sm:$0xf]
    %v124 = vld [vmem:[#allocation5 + $0x14] sm:$0xf]
    %v125 = vld [vmem:[#allocation5 + $0x18] sm:$0xf]
    %v126 = vld [vmem:[#allocation5 + $0x1c] sm:$0xf]
    %v127 = vld [vmem:[#allocation5 + $0x20] sm:$0xf]
    %v128 = vld [vmem:[#allocation5 + $0x24] sm:$0xf]
    %v129 = vld [vmem:[#allocation5 + $0x28] sm:$0xf]
    %v130 = vld [vmem:[#allocation5 + $0x2c] sm:$0xf]
    %v131 = vld [vmem:[#allocation5 + $0x30] sm:$0xf]
    %v132 = vld [vmem:[#allocation5 + $0x34] sm:$0xf]
    %v133 = vld [vmem:[#allocation5 + $0x38] sm:$0xf]
    %v134 = vld [vmem:[#allocation5 + $0x3c] sm:$0xf]
    %v135 = vld [vmem:[#allocation5 + $0x40] sm:$0xf]
    %v136 = vld [vmem:[#allocation5 + $0x44] sm:$0xf]
    %v137 = vld [vmem:[#allocation5 + $0x48] sm:$0xf]
    %v138 = vld [vmem:[#allocation5 + $0x4c] sm:$0xf]
    %v139 = vld [vmem:[#allocation5 + $0x50] sm:$0xf]
    %v140 = vld [vmem:[#allocation5 + $0x54] sm:$0xf]
    %v141 = vld [vmem:[#allocation5 + $0x58] sm:$0xf]
    %v142 = vld [vmem:[#allocation5 + $0x5c] sm:$0xf]
    %v143 = vld [vmem:[#allocation5 + $0x60] sm:$0xf]
    %v144 = vld [vmem:[#allocation5 + $0x64] sm:$0xf]
    %v145 = vld [vmem:[#allocation5 + $0x68] sm:$0xf]
    %v146 = vld [vmem:[#allocation5 + $0x6c] sm:$0xf]
    %v147 = vld [vmem:[#allocation5 + $0x70] sm:$0xf]
    %v148 = vld [vmem:[#allocation5 + $0x74] sm:$0xf]
    %v149 = vld [vmem:[#allocation5 + $0x78] sm:$0xf]
    %v150 = vld [vmem:[#allocation5 + $0x7c] sm:$0xf]
    %v151 = vld [vmem:[%s2] sm:$0x1]
    %v153 = vlaneseq
    %v154 = vshrl.u32 %v153, 7
    %v155 = vsub.s32 0, %v154
    %v156 = vrot.slane %v151, %v155
    %v190 = vunpack.c.l.b16 %v87
    %v191 = vunpack.c.h.b16 %v87
    %v192 = vunpack.c.l.b16 %v88
    %v193 = vunpack.c.h.b16 %v88
    %v194 = vunpack.c.l.b16 %v89
    %v195 = vunpack.c.h.b16 %v89
    %v196 = vunpack.c.l.b16 %v90
    %v197 = vunpack.c.h.b16 %v90
    %v198 = vunpack.c.l.b16 %v91
    %v199 = vunpack.c.h.b16 %v91
    %v200 = vunpack.c.l.b16 %v92
    %v201 = vunpack.c.h.b16 %v92
    %v202 = vunpack.c.l.b16 %v93
    %v203 = vunpack.c.h.b16 %v93
    %v204 = vunpack.c.l.b16 %v94
    %v205 = vunpack.c.h.b16 %v94
    %v206 = vunpack.c.l.b16 %v95
    %v207 = vunpack.c.h.b16 %v95
    %v208 = vunpack.c.l.b16 %v96
    %v209 = vunpack.c.h.b16 %v96
    %v210 = vunpack.c.l.b16 %v97
    %v211 = vunpack.c.h.b16 %v97
    %v212 = vunpack.c.l.b16 %v98
    %v213 = vunpack.c.h.b16 %v98
    %v214 = vunpack.c.l.b16 %v99
    %v215 = vunpack.c.h.b16 %v99
    %v216 = vunpack.c.l.b16 %v100
    %v217 = vunpack.c.h.b16 %v100
    %v218 = vunpack.c.l.b16 %v101
    %v219 = vunpack.c.h.b16 %v101
    %v220 = vunpack.c.l.b16 %v102
    %v221 = vunpack.c.h.b16 %v102
    %v222 = vunpack.c.l.b16 %v103
    %v223 = vunpack.c.h.b16 %v103
    %v224 = vunpack.c.l.b16 %v104
    %v225 = vunpack.c.h.b16 %v104
    %v226 = vunpack.c.l.b16 %v105
    %v227 = vunpack.c.h.b16 %v105
    %v228 = vunpack.c.l.b16 %v106
    %v229 = vunpack.c.h.b16 %v106
    %v230 = vunpack.c.l.b16 %v107
    %v231 = vunpack.c.h.b16 %v107
    %v232 = vunpack.c.l.b16 %v108
    %v233 = vunpack.c.h.b16 %v108
    %v234 = vunpack.c.l.b16 %v109
    %v235 = vunpack.c.h.b16 %v109
    %v236 = vunpack.c.l.b16 %v110
    %v237 = vunpack.c.h.b16 %v110
    %v238 = vunpack.c.l.b16 %v111
    %v239 = vunpack.c.h.b16 %v111
    %v240 = vunpack.c.l.b16 %v112
    %v241 = vunpack.c.h.b16 %v112
    %v242 = vunpack.c.l.b16 %v113
    %v243 = vunpack.c.h.b16 %v113
    %v244 = vunpack.c.l.b16 %v114
    %v245 = vunpack.c.h.b16 %v114
    %v246 = vunpack.c.l.b16 %v115
    %v247 = vunpack.c.h.b16 %v115
    %v248 = vunpack.c.l.b16 %v116
    %v249 = vunpack.c.h.b16 %v116
    %v250 = vunpack.c.l.b16 %v117
    %v251 = vunpack.c.h.b16 %v117
    %v252 = vunpack.c.l.b16 %v118
    %v253 = vunpack.c.h.b16 %v118
    %v254 = vpack.c.b16 %v192, %v190
    %v255 = vpack.c.b16 %v193, %v191
    %v256 = vpack.c.b16 %v196, %v194
    %v257 = vpack.c.b16 %v197, %v195
    %v258 = vpack.c.b16 %v200, %v198
    %v259 = vpack.c.b16 %v201, %v199
    %v260 = vpack.c.b16 %v204, %v202
    %v261 = vpack.c.b16 %v205, %v203
    %v262 = vpack.c.b16 %v208, %v206
    %v263 = vpack.c.b16 %v209, %v207
    %v264 = vpack.c.b16 %v212, %v210
    %v265 = vpack.c.b16 %v213, %v211
    %v266 = vpack.c.b16 %v216, %v214
    %v267 = vpack.c.b16 %v217, %v215
    %v268 = vpack.c.b16 %v220, %v218
    %v269 = vpack.c.b16 %v221, %v219
    %v270 = vpack.c.b16 %v224, %v222
    %v271 = vpack.c.b16 %v225, %v223
    %v272 = vpack.c.b16 %v228, %v226
    %v273 = vpack.c.b16 %v229, %v227
    %v274 = vpack.c.b16 %v232, %v230
    %v275 = vpack.c.b16 %v233, %v231
    %v276 = vpack.c.b16 %v236, %v234
    %v277 = vpack.c.b16 %v237, %v235
    %v278 = vpack.c.b16 %v240, %v238
    %v279 = vpack.c.b16 %v241, %v239
    %v280 = vpack.c.b16 %v244, %v242
    %v281 = vpack.c.b16 %v245, %v243
    %v282 = vpack.c.b16 %v248, %v246
    %v283 = vpack.c.b16 %v249, %v247
    %v284 = vpack.c.b16 %v252, %v250
    %v285 = vpack.c.b16 %v253, %v251
    %v350 = vunpack.c.l.b16 %v119
    %v351 = vunpack.c.l.b16 %v120
    %v352 = vunpack.c.l.b16 %v121
    %v353 = vunpack.c.l.b16 %v122
    %v354 = vunpack.c.l.b16 %v123
    %v355 = vunpack.c.l.b16 %v124
    %v356 = vunpack.c.l.b16 %v125
    %v357 = vunpack.c.l.b16 %v126
    %v358 = vunpack.c.l.b16 %v127
    %v359 = vunpack.c.l.b16 %v128
    %v360 = vunpack.c.l.b16 %v129
    %v361 = vunpack.c.l.b16 %v130
    %v362 = vunpack.c.l.b16 %v131
    %v363 = vunpack.c.l.b16 %v132
    %v364 = vunpack.c.l.b16 %v133
    %v365 = vunpack.c.l.b16 %v134
    %v366 = vunpack.c.l.b16 %v135
    %v367 = vunpack.c.l.b16 %v136
    %v368 = vunpack.c.l.b16 %v137
    %v369 = vunpack.c.l.b16 %v138
    %v370 = vunpack.c.l.b16 %v139
    %v371 = vunpack.c.l.b16 %v140
    %v372 = vunpack.c.l.b16 %v141
    %v373 = vunpack.c.l.b16 %v142
    %v374 = vunpack.c.l.b16 %v143
    %v375 = vunpack.c.l.b16 %v144
    %v376 = vunpack.c.l.b16 %v145
    %v377 = vunpack.c.l.b16 %v146
    %v378 = vunpack.c.l.b16 %v147
    %v379 = vunpack.c.l.b16 %v148
    %v380 = vunpack.c.l.b16 %v149
    %v381 = vunpack.c.l.b16 %v150
    %v382 = vpack.c.b16 %v351, %v350
    %v383 = vpack.c.b16 %v353, %v352
    %v384 = vpack.c.b16 %v355, %v354
    %v385 = vpack.c.b16 %v357, %v356
    %v386 = vpack.c.b16 %v359, %v358
    %v387 = vpack.c.b16 %v361, %v360
    %v388 = vpack.c.b16 %v363, %v362
    %v389 = vpack.c.b16 %v365, %v364
    %v390 = vpack.c.b16 %v367, %v366
    %v391 = vpack.c.b16 %v369, %v368
    %v392 = vpack.c.b16 %v371, %v370
    %v393 = vpack.c.b16 %v373, %v372
    %v394 = vpack.c.b16 %v375, %v374
    %v395 = vpack.c.b16 %v377, %v376
    %v396 = vpack.c.b16 %v379, %v378
    %v397 = vpack.c.b16 %v381, %v380
    %414 = vmatprep.subr.bf16.mxu0 0
    %415 = vmatpush1.bf16.msra.mxu0 %v389
    %416 = vmatprep.subr.bf16.mxu0 0
    %417 = vmatpush1.bf16.msra.mxu0 %v388
    %418 = vmatprep.subr.bf16.mxu0 0
    %419 = vmatpush1.bf16.msra.mxu0 %v387
    %420 = vmatprep.subr.bf16.mxu0 0
    %421 = vmatpush1.bf16.msra.mxu0 %v386
    %422 = vmatprep.subr.bf16.mxu0 0
    %423 = vmatpush1.bf16.msra.mxu0 %v385
    %424 = vmatprep.subr.bf16.mxu0 0
    %425 = vmatpush1.bf16.msra.mxu0 %v384
    %426 = vmatprep.subr.bf16.mxu0 0
    %427 = vmatpush1.bf16.msra.mxu0 %v383
    %428 = vmatprep.subr.bf16.mxu0 0
    %429 = vmatpush1.bf16.msra.mxu0 %v382
    %430 = vmatprep.subr.bf16.mxu0 0
    %431 = vmatpush2.bf16.msra.mxu0 %v397
    %432 = vmatprep.subr.bf16.mxu0 0
    %433 = vmatpush2.bf16.msra.mxu0 %v396
    %434 = vmatprep.subr.bf16.mxu0 0
    %435 = vmatpush2.bf16.msra.mxu0 %v395
    %436 = vmatprep.subr.bf16.mxu0 0
    %437 = vmatpush2.bf16.msra.mxu0 %v394
    %438 = vmatprep.subr.bf16.mxu0 0
    %439 = vmatpush2.bf16.msra.mxu0 %v393
    %440 = vmatprep.subr.bf16.mxu0 0
    %441 = vmatpush2.bf16.msra.mxu0 %v392
    %442 = vmatprep.subr.bf16.mxu0 0
    %443 = vmatpush2.bf16.msra.mxu0 %v391
    %444 = vmatprep.subr.bf16.mxu0 0
    %445 = vmatpush2.bf16.msra.mxu0 %v390
    %446 = vmatprep.mubr.bf16.mxu0 %v255
    %447 = vmatmul.mubr.bf16.gmra.mxu0 %v254
    %v448 = vpop.f32.mrf.mxu0
    %v449 = vadd.f32 %v156, %v448
    %v450 = vpop.f32.mrf.mxu0
    %v451 = vpop.f32.mrf.mxu0
    %v452 = vadd.f32 %v156, %v451
    %v453 = vpop.f32.mrf.mxu0
    %454 = vmatprep.mubr.bf16.mxu0 %v257
    %455 = vmatmul.mubr.bf16.gmra.mxu0 %v256
    %v456 = vpop.f32.mrf.mxu0
    %v457 = vadd.f32 %v156, %v456
    %v458 = vpop.f32.mrf.mxu0
    %v459 = vpop.f32.mrf.mxu0
    %v460 = vadd.f32 %v156, %v459
    %v461 = vpop.f32.mrf.mxu0
    %462 = vmatprep.mubr.bf16.mxu0 %v259
    %463 = vmatmul.mubr.bf16.gmra.mxu0 %v258
    %v464 = vpop.f32.mrf.mxu0
    %v465 = vadd.f32 %v156, %v464
    %v466 = vpop.f32.mrf.mxu0
    %v467 = vpop.f32.mrf.mxu0
    %v468 = vadd.f32 %v156, %v467
    %v469 = vpop.f32.mrf.mxu0
    %470 = vmatprep.mubr.bf16.mxu0 %v261
    %471 = vmatmul.mubr.bf16.gmra.mxu0 %v260
    %v472 = vpop.f32.mrf.mxu0
    %v473 = vadd.f32 %v156, %v472
    %v474 = vpop.f32.mrf.mxu0
    %v475 = vpop.f32.mrf.mxu0
    %v476 = vadd.f32 %v156, %v475
    %v477 = vpop.f32.mrf.mxu0
    %478 = vmatprep.mubr.bf16.mxu0 %v263
    %479 = vmatmul.mubr.bf16.gmra.mxu0 %v262
    %v480 = vpop.f32.mrf.mxu0
    %v481 = vadd.f32 %v156, %v480
    %v482 = vpop.f32.mrf.mxu0
    %v483 = vpop.f32.mrf.mxu0
    %v484 = vadd.f32 %v156, %v483
    %v485 = vpop.f32.mrf.mxu0
    %486 = vmatprep.mubr.bf16.mxu0 %v265
    %487 = vmatmul.mubr.bf16.gmra.mxu0 %v264
    %v488 = vpop.f32.mrf.mxu0
    %v489 = vadd.f32 %v156, %v488
    %v490 = vpop.f32.mrf.mxu0
    %v491 = vpop.f32.mrf.mxu0
    %v492 = vadd.f32 %v156, %v491
    %v493 = vpop.f32.mrf.mxu0
    %494 = vmatprep.mubr.bf16.mxu0 %v267
    %495 = vmatmul.mubr.bf16.gmra.mxu0 %v266
    %v496 = vpop.f32.mrf.mxu0
    %v497 = vadd.f32 %v156, %v496
    %v498 = vpop.f32.mrf.mxu0
    %v499 = vpop.f32.mrf.mxu0
    %v500 = vadd.f32 %v156, %v499
    %v501 = vpop.f32.mrf.mxu0
    %502 = vmatprep.mubr.bf16.mxu0 %v269
    %503 = vmatmul.mubr.bf16.gmra.mxu0 %v268
    %v504 = vpop.f32.mrf.mxu0
    %v505 = vadd.f32 %v156, %v504
    %v506 = vpop.f32.mrf.mxu0
    %v507 = vpop.f32.mrf.mxu0
    %v508 = vadd.f32 %v156, %v507
    %v509 = vpop.f32.mrf.mxu0
    %510 = vmatprep.mubr.bf16.mxu0 %v271
    %511 = vmatmul.mubr.bf16.gmra.mxu0 %v270
    %v512 = vpop.f32.mrf.mxu0
    %v513 = vadd.f32 %v156, %v512
    %v514 = vpop.f32.mrf.mxu0
    %v515 = vpop.f32.mrf.mxu0
    %v516 = vadd.f32 %v156, %v515
    %v517 = vpop.f32.mrf.mxu0
    %518 = vmatprep.mubr.bf16.mxu0 %v273
    %519 = vmatmul.mubr.bf16.gmra.mxu0 %v272
    %v520 = vpop.f32.mrf.mxu0
    %v521 = vadd.f32 %v156, %v520
    %v522 = vpop.f32.mrf.mxu0
    %v523 = vpop.f32.mrf.mxu0
    %v524 = vadd.f32 %v156, %v523
    %v525 = vpop.f32.mrf.mxu0
    %526 = vmatprep.mubr.bf16.mxu0 %v275
    %527 = vmatmul.mubr.bf16.gmra.mxu0 %v274
    %v528 = vpop.f32.mrf.mxu0
    %v529 = vadd.f32 %v156, %v528
    %v530 = vpop.f32.mrf.mxu0
    %v531 = vpop.f32.mrf.mxu0
    %v532 = vadd.f32 %v156, %v531
    %v533 = vpop.f32.mrf.mxu0
    %534 = vmatprep.mubr.bf16.mxu0 %v277
    %535 = vmatmul.mubr.bf16.gmra.mxu0 %v276
    %v536 = vpop.f32.mrf.mxu0
    %v537 = vadd.f32 %v156, %v536
    %v538 = vpop.f32.mrf.mxu0
    %v539 = vpop.f32.mrf.mxu0
    %v540 = vadd.f32 %v156, %v539
    %v541 = vpop.f32.mrf.mxu0
    %542 = vmatprep.mubr.bf16.mxu0 %v279
    %543 = vmatmul.mubr.bf16.gmra.mxu0 %v278
    %v544 = vpop.f32.mrf.mxu0
    %v545 = vadd.f32 %v156, %v544
    %v546 = vpop.f32.mrf.mxu0
    %v547 = vpop.f32.mrf.mxu0
    %v548 = vadd.f32 %v156, %v547
    %v549 = vpop.f32.mrf.mxu0
    %550 = vmatprep.mubr.bf16.mxu0 %v281
    %551 = vmatmul.mubr.bf16.gmra.mxu0 %v280
    %v552 = vpop.f32.mrf.mxu0
    %v553 = vadd.f32 %v156, %v552
    %v554 = vpop.f32.mrf.mxu0
    %v555 = vpop.f32.mrf.mxu0
    %v556 = vadd.f32 %v156, %v555
    %v557 = vpop.f32.mrf.mxu0
    %558 = vmatprep.mubr.bf16.mxu0 %v283
    %559 = vmatmul.mubr.bf16.gmra.mxu0 %v282
    %v560 = vpop.f32.mrf.mxu0
    %v561 = vadd.f32 %v156, %v560
    %v562 = vpop.f32.mrf.mxu0
    %v563 = vpop.f32.mrf.mxu0
    %v564 = vadd.f32 %v156, %v563
    %v565 = vpop.f32.mrf.mxu0
    %566 = vmatprep.mubr.bf16.mxu0 %v285
    %567 = vmatmul.mubr.bf16.gmra.mxu0 %v284
    %v568 = vpop.f32.mrf.mxu0
    %v569 = vadd.f32 %v156, %v568
    %v570 = vpop.f32.mrf.mxu0
    %v571 = vpop.f32.mrf.mxu0
    %v572 = vadd.f32 %v156, %v571
    %v573 = vpop.f32.mrf.mxu0
    %574 = vdwg.mxu0
    %575 = vmax.xlane.f32.xlu0 %v449
    %v576 = vpop.xlane.xlu0 %575
    %577 = vmax.xlane.f32.xlu0 %v452
    %v578 = vpop.xlane.xlu0 %577
    %579 = vmax.xlane.f32.xlu0 %v457
    %v580 = vpop.xlane.xlu0 %579
    %581 = vmax.xlane.f32.xlu0 %v460
    %v582 = vpop.xlane.xlu0 %581
    %583 = vmax.xlane.f32.xlu0 %v465
    %v584 = vpop.xlane.xlu0 %583
    %585 = vmax.xlane.f32.xlu0 %v468
    %v586 = vpop.xlane.xlu0 %585
    %587 = vmax.xlane.f32.xlu0 %v473
    %v588 = vpop.xlane.xlu0 %587
    %589 = vmax.xlane.f32.xlu0 %v476
    %v590 = vpop.xlane.xlu0 %589
    %591 = vmax.xlane.f32.xlu0 %v481
    %v592 = vpop.xlane.xlu0 %591
    %593 = vmax.xlane.f32.xlu0 %v484
    %v594 = vpop.xlane.xlu0 %593
    %595 = vmax.xlane.f32.xlu0 %v489
    %v596 = vpop.xlane.xlu0 %595
    %597 = vmax.xlane.f32.xlu0 %v492
    %v598 = vpop.xlane.xlu0 %597
    %599 = vmax.xlane.f32.xlu0 %v497
    %v600 = vpop.xlane.xlu0 %599
    %601 = vmax.xlane.f32.xlu0 %v500
    %v602 = vpop.xlane.xlu0 %601
    %603 = vmax.xlane.f32.xlu0 %v505
    %v604 = vpop.xlane.xlu0 %603
    %605 = vmax.xlane.f32.xlu0 %v508
    %v606 = vpop.xlane.xlu0 %605
    %607 = vmax.xlane.f32.xlu0 %v513
    %v608 = vpop.xlane.xlu0 %607
    %609 = vmax.xlane.f32.xlu0 %v516
    %v610 = vpop.xlane.xlu0 %609
    %611 = vmax.xlane.f32.xlu0 %v521
    %v612 = vpop.xlane.xlu0 %611
    %613 = vmax.xlane.f32.xlu0 %v524
    %v614 = vpop.xlane.xlu0 %613
    %615 = vmax.xlane.f32.xlu0 %v529
    %v616 = vpop.xlane.xlu0 %615
    %617 = vmax.xlane.f32.xlu0 %v532
    %v618 = vpop.xlane.xlu0 %617
    %619 = vmax.xlane.f32.xlu0 %v537
    %v620 = vpop.xlane.xlu0 %619
    %621 = vmax.xlane.f32.xlu0 %v540
    %v622 = vpop.xlane.xlu0 %621
    %623 = vmax.xlane.f32.xlu0 %v545
    %v624 = vpop.xlane.xlu0 %623
    %625 = vmax.xlane.f32.xlu0 %v548
    %v626 = vpop.xlane.xlu0 %625
    %627 = vmax.xlane.f32.xlu0 %v553
    %v628 = vpop.xlane.xlu0 %627
    %629 = vmax.xlane.f32.xlu0 %v556
    %v630 = vpop.xlane.xlu0 %629
    %631 = vmax.xlane.f32.xlu0 %v561
    %v632 = vpop.xlane.xlu0 %631
    %633 = vmax.xlane.f32.xlu0 %v564
    %v634 = vpop.xlane.xlu0 %633
    %635 = vmax.xlane.f32.xlu0 %v569
    %v636 = vpop.xlane.xlu0 %635
    %637 = vmax.xlane.f32.xlu0 %v572
    %v638 = vpop.xlane.xlu0 %637
    %v639 = vsub.f32 %v449, %v576
    %v640 = vsub.f32 %v452, %v578
    %v641 = vsub.f32 %v457, %v580
    %v642 = vsub.f32 %v460, %v582
    %v643 = vsub.f32 %v465, %v584
    %v644 = vsub.f32 %v468, %v586
    %v645 = vsub.f32 %v473, %v588
    %v646 = vsub.f32 %v476, %v590
    %v647 = vsub.f32 %v481, %v592
    %v648 = vsub.f32 %v484, %v594
    %v649 = vsub.f32 %v489, %v596
    %v650 = vsub.f32 %v492, %v598
    %v651 = vsub.f32 %v497, %v600
    %v652 = vsub.f32 %v500, %v602
    %v653 = vsub.f32 %v505, %v604
    %v654 = vsub.f32 %v508, %v606
    %v655 = vsub.f32 %v513, %v608
    %v656 = vsub.f32 %v516, %v610
    %v657 = vsub.f32 %v521, %v612
    %v658 = vsub.f32 %v524, %v614
    %v659 = vsub.f32 %v529, %v616
    %v660 = vsub.f32 %v532, %v618
    %v661 = vsub.f32 %v537, %v620
    %v662 = vsub.f32 %v540, %v622
    %v663 = vsub.f32 %v545, %v624
    %v664 = vsub.f32 %v548, %v626
    %v665 = vsub.f32 %v553, %v628
    %v666 = vsub.f32 %v556, %v630
    %v667 = vsub.f32 %v561, %v632
    %v668 = vsub.f32 %v564, %v634
    %v669 = vsub.f32 %v569, %v636
    %v670 = vsub.f32 %v572, %v638
    %v671 = vmul.f32 %v639, 1.442695
    %v672 = vpow.pop %v671
    %v673 = vmul.f32 %v640, 1.442695
    %v674 = vpow.pop %v673
    %v675 = vmul.f32 %v641, 1.442695
    %v676 = vpow.pop %v675
    %v677 = vmul.f32 %v642, 1.442695
    %v678 = vpow.pop %v677
    %v679 = vmul.f32 %v643, 1.442695
    %v680 = vpow.pop %v679
    %v681 = vmul.f32 %v644, 1.442695
    %v682 = vpow.pop %v681
    %v683 = vmul.f32 %v645, 1.442695
    %v684 = vpow.pop %v683
    %v685 = vmul.f32 %v646, 1.442695
    %v686 = vpow.pop %v685
    %v687 = vmul.f32 %v647, 1.442695
    %v688 = vpow.pop %v687
    %v689 = vmul.f32 %v648, 1.442695
    %v690 = vpow.pop %v689
    %v691 = vmul.f32 %v649, 1.442695
    %v692 = vpow.pop %v691
    %v693 = vmul.f32 %v650, 1.442695
    %v694 = vpow.pop %v693
    %v695 = vmul.f32 %v651, 1.442695
    %v696 = vpow.pop %v695
    %v697 = vmul.f32 %v652, 1.442695
    %v698 = vpow.pop %v697
    %v699 = vmul.f32 %v653, 1.442695
    %v700 = vpow.pop %v699
    %v701 = vmul.f32 %v654, 1.442695
    %v702 = vpow.pop %v701
    %v703 = vmul.f32 %v655, 1.442695
    %v704 = vpow.pop %v703
    %v705 = vmul.f32 %v656, 1.442695
    %v706 = vpow.pop %v705
    %v707 = vmul.f32 %v657, 1.442695
    %v708 = vpow.pop %v707
    %v709 = vmul.f32 %v658, 1.442695
    %v710 = vpow.pop %v709
    %v711 = vmul.f32 %v659, 1.442695
    %v712 = vpow.pop %v711
    %v713 = vmul.f32 %v660, 1.442695
    %v714 = vpow.pop %v713
    %v715 = vmul.f32 %v661, 1.442695
    %v716 = vpow.pop %v715
    %v717 = vmul.f32 %v662, 1.442695
    %v718 = vpow.pop %v717
    %v719 = vmul.f32 %v663, 1.442695
    %v720 = vpow.pop %v719
    %v721 = vmul.f32 %v664, 1.442695
    %v722 = vpow.pop %v721
    %v723 = vmul.f32 %v665, 1.442695
    %v724 = vpow.pop %v723
    %v725 = vmul.f32 %v666, 1.442695
    %v726 = vpow.pop %v725
    %v727 = vmul.f32 %v667, 1.442695
    %v728 = vpow.pop %v727
    %v729 = vmul.f32 %v668, 1.442695
    %v730 = vpow.pop %v729
    %v731 = vmul.f32 %v669, 1.442695
    %v732 = vpow.pop %v731
    %v733 = vmul.f32 %v670, 1.442695
    %v734 = vpow.pop %v733
    %735 = vadd.xlane.f32.xlu0 %v672
    %v736 = vpop.xlane.xlu0 %735
    %737 = vadd.xlane.f32.xlu0 %v674
    %v738 = vpop.xlane.xlu0 %737
    %739 = vadd.xlane.f32.xlu0 %v676
    %v740 = vpop.xlane.xlu0 %739
    %741 = vadd.xlane.f32.xlu0 %v678
    %v742 = vpop.xlane.xlu0 %741
    %743 = vadd.xlane.f32.xlu0 %v680
    %v744 = vpop.xlane.xlu0 %743
    %745 = vadd.xlane.f32.xlu0 %v682
    %v746 = vpop.xlane.xlu0 %745
    %747 = vadd.xlane.f32.xlu0 %v684
    %v748 = vpop.xlane.xlu0 %747
    %749 = vadd.xlane.f32.xlu0 %v686
    %v750 = vpop.xlane.xlu0 %749
    %751 = vadd.xlane.f32.xlu0 %v688
    %v752 = vpop.xlane.xlu0 %751
    %753 = vadd.xlane.f32.xlu0 %v690
    %v754 = vpop.xlane.xlu0 %753
    %755 = vadd.xlane.f32.xlu0 %v692
    %v756 = vpop.xlane.xlu0 %755
    %757 = vadd.xlane.f32.xlu0 %v694
    %v758 = vpop.xlane.xlu0 %757
    %759 = vadd.xlane.f32.xlu0 %v696
    %v760 = vpop.xlane.xlu0 %759
    %761 = vadd.xlane.f32.xlu0 %v698
    %v762 = vpop.xlane.xlu0 %761
    %763 = vadd.xlane.f32.xlu0 %v700
    %v764 = vpop.xlane.xlu0 %763
    %765 = vadd.xlane.f32.xlu0 %v702
    %v766 = vpop.xlane.xlu0 %765
    %767 = vadd.xlane.f32.xlu0 %v704
    %v768 = vpop.xlane.xlu0 %767
    %769 = vadd.xlane.f32.xlu0 %v706
    %v770 = vpop.xlane.xlu0 %769
    %771 = vadd.xlane.f32.xlu0 %v708
    %v772 = vpop.xlane.xlu0 %771
    %773 = vadd.xlane.f32.xlu0 %v710
    %v774 = vpop.xlane.xlu0 %773
    %775 = vadd.xlane.f32.xlu0 %v712
    %v776 = vpop.xlane.xlu0 %775
    %777 = vadd.xlane.f32.xlu0 %v714
    %v778 = vpop.xlane.xlu0 %777
    %779 = vadd.xlane.f32.xlu0 %v716
    %v780 = vpop.xlane.xlu0 %779
    %781 = vadd.xlane.f32.xlu0 %v718
    %v782 = vpop.xlane.xlu0 %781
    %783 = vadd.xlane.f32.xlu0 %v720
    %v784 = vpop.xlane.xlu0 %783
    %785 = vadd.xlane.f32.xlu0 %v722
    %v786 = vpop.xlane.xlu0 %785
    %787 = vadd.xlane.f32.xlu0 %v724
    %v788 = vpop.xlane.xlu0 %787
    %789 = vadd.xlane.f32.xlu0 %v726
    %v790 = vpop.xlane.xlu0 %789
    %791 = vadd.xlane.f32.xlu0 %v728
    %v792 = vpop.xlane.xlu0 %791
    %793 = vadd.xlane.f32.xlu0 %v730
    %v794 = vpop.xlane.xlu0 %793
    %795 = vadd.xlane.f32.xlu0 %v732
    %v796 = vpop.xlane.xlu0 %795
    %797 = vadd.xlane.f32.xlu0 %v734
    %v798 = vpop.xlane.xlu0 %797
    %v799 = vrcp.pop %v736
    %v800 = vrcp.pop %v738
    %v801 = vrcp.pop %v740
    %v802 = vrcp.pop %v742
    %v803 = vrcp.pop %v744
    %v804 = vrcp.pop %v746
    %v805 = vrcp.pop %v748
    %v806 = vrcp.pop %v750
    %v807 = vrcp.pop %v752
    %v808 = vrcp.pop %v754
    %v809 = vrcp.pop %v756
    %v810 = vrcp.pop %v758
    %v811 = vrcp.pop %v760
    %v812 = vrcp.pop %v762
    %v813 = vrcp.pop %v764
    %v814 = vrcp.pop %v766
    %v815 = vrcp.pop %v768
    %v816 = vrcp.pop %v770
    %v817 = vrcp.pop %v772
    %v818 = vrcp.pop %v774
    %v819 = vrcp.pop %v776
    %v820 = vrcp.pop %v778
    %v821 = vrcp.pop %v780
    %v822 = vrcp.pop %v782
    %v823 = vrcp.pop %v784
    %v824 = vrcp.pop %v786
    %v825 = vrcp.pop %v788
    %v826 = vrcp.pop %v790
    %v827 = vrcp.pop %v792
    %v828 = vrcp.pop %v794
    %v829 = vrcp.pop %v796
    %v830 = vrcp.pop %v798
    %v831 = vmul.f32 %v672, %v799
    %v832 = vmul.f32 %v674, %v800
    %v833 = vmul.f32 %v676, %v801
    %v834 = vmul.f32 %v678, %v802
    %v835 = vmul.f32 %v680, %v803
    %v836 = vmul.f32 %v682, %v804
    %v837 = vmul.f32 %v684, %v805
    %v838 = vmul.f32 %v686, %v806
    %v839 = vmul.f32 %v688, %v807
    %v840 = vmul.f32 %v690, %v808
    %v841 = vmul.f32 %v692, %v809
    %v842 = vmul.f32 %v694, %v810
    %v843 = vmul.f32 %v696, %v811
    %v844 = vmul.f32 %v698, %v812
    %v845 = vmul.f32 %v700, %v813
    %v846 = vmul.f32 %v702, %v814
    %v847 = vmul.f32 %v704, %v815
    %v848 = vmul.f32 %v706, %v816
    %v849 = vmul.f32 %v708, %v817
    %v850 = vmul.f32 %v710, %v818
    %v851 = vmul.f32 %v712, %v819
    %v852 = vmul.f32 %v714, %v820
    %v853 = vmul.f32 %v716, %v821
    %v854 = vmul.f32 %v718, %v822
    %v855 = vmul.f32 %v720, %v823
    %v856 = vmul.f32 %v722, %v824
    %v857 = vmul.f32 %v724, %v825
    %v858 = vmul.f32 %v726, %v826
    %v859 = vmul.f32 %v728, %v827
    %v860 = vmul.f32 %v730, %v828
    %v861 = vmul.f32 %v732, %v829
    %v862 = vmul.f32 %v734, %v830
    %v863 = vld [vmem:[#allocation7] sm:$0xff]
    %v864 = vld [vmem:[#allocation7 + $0x8] sm:$0xff]
    %v865 = vld [vmem:[#allocation7 + $0x10] sm:$0xff]
    %v866 = vld [vmem:[#allocation7 + $0x18] sm:$0xff]
    %v867 = vld [vmem:[#allocation7 + $0x20] sm:$0xff]
    %v868 = vld [vmem:[#allocation7 + $0x28] sm:$0xff]
    %v869 = vld [vmem:[#allocation7 + $0x30] sm:$0xff]
    %v870 = vld [vmem:[#allocation7 + $0x38] sm:$0xff]
    %v871 = vld [vmem:[#allocation7 + $0x40] sm:$0xff]
    %v872 = vld [vmem:[#allocation7 + $0x48] sm:$0xff]
    %v873 = vld [vmem:[#allocation7 + $0x50] sm:$0xff]
    %v874 = vld [vmem:[#allocation7 + $0x58] sm:$0xff]
    %v875 = vld [vmem:[#allocation7 + $0x60] sm:$0xff]
    %v876 = vld [vmem:[#allocation7 + $0x68] sm:$0xff]
    %v877 = vld [vmem:[#allocation7 + $0x70] sm:$0xff]
    %v878 = vld [vmem:[#allocation7 + $0x78] sm:$0xff]
    %v879 = vld [vmem:[#allocation7 + $0x80] sm:$0xff]
    %v880 = vld [vmem:[#allocation7 + $0x88] sm:$0xff]
    %v881 = vld [vmem:[#allocation7 + $0x90] sm:$0xff]
    %v882 = vld [vmem:[#allocation7 + $0x98] sm:$0xff]
    %v883 = vld [vmem:[#allocation7 + $0xa0] sm:$0xff]
    %v884 = vld [vmem:[#allocation7 + $0xa8] sm:$0xff]
    %v885 = vld [vmem:[#allocation7 + $0xb0] sm:$0xff]
    %v886 = vld [vmem:[#allocation7 + $0xb8] sm:$0xff]
    %v887 = vld [vmem:[#allocation7 + $0xc0] sm:$0xff]
    %v888 = vld [vmem:[#allocation7 + $0xc8] sm:$0xff]
    %v889 = vld [vmem:[#allocation7 + $0xd0] sm:$0xff]
    %v890 = vld [vmem:[#allocation7 + $0xd8] sm:$0xff]
    %v891 = vld [vmem:[#allocation7 + $0xe0] sm:$0xff]
    %v892 = vld [vmem:[#allocation7 + $0xe8] sm:$0xff]
    %v893 = vld [vmem:[#allocation7 + $0xf0] sm:$0xff]
    %v894 = vld [vmem:[#allocation7 + $0xf8] sm:$0xff]
    %v895 = vpack.c.bf16 %v832, %v831
    %v896 = vpack.c.bf16 %v834, %v833
    %v897 = vpack.c.bf16 %v836, %v835
    %v898 = vpack.c.bf16 %v838, %v837
    %v899 = vpack.c.bf16 %v840, %v839
    %v900 = vpack.c.bf16 %v842, %v841
    %v901 = vpack.c.bf16 %v844, %v843
    %v902 = vpack.c.bf16 %v846, %v845
    %v903 = vpack.c.bf16 %v848, %v847
    %v904 = vpack.c.bf16 %v850, %v849
    %v905 = vpack.c.bf16 %v852, %v851
    %v906 = vpack.c.bf16 %v854, %v853
    %v907 = vpack.c.bf16 %v856, %v855
    %v908 = vpack.c.bf16 %v858, %v857
    %v909 = vpack.c.bf16 %v860, %v859
    %v910 = vpack.c.bf16 %v862, %v861
    %911 = vxpose.xlu0.c.b16.start [1/8] %v895, 128
    %912 = vxpose.xlu0.c.b16.cont [2/8] %v896, 128
    %913 = vxpose.xlu0.c.b16.cont [3/8] %v897, 128
    %914 = vxpose.xlu0.c.b16.cont [4/8] %v898, 128
    %915 = vxpose.xlu0.c.b16.cont [5/8] %v899, 128
    %916 = vxpose.xlu0.c.b16.cont [6/8] %v900, 128
    %917 = vxpose.xlu0.c.b16.cont [7/8] %v901, 128
    %918 = vxpose.xlu0.c.b16.end [8/8] %v902, 128
    %v919 = vpop.trf.xlu0
    %v920 = vpop.trf.xlu0
    %v921 = vpop.trf.xlu0
    %v922 = vpop.trf.xlu0
    %v923 = vpop.trf.xlu0
    %v924 = vpop.trf.xlu0
    %v925 = vpop.trf.xlu0
    %v926 = vpop.trf.xlu0
    %927 = vxpose.xlu0.c.b16.start [1/8] %v903, 128
    %928 = vxpose.xlu0.c.b16.cont [2/8] %v904, 128
    %929 = vxpose.xlu0.c.b16.cont [3/8] %v905, 128
    %930 = vxpose.xlu0.c.b16.cont [4/8] %v906, 128
    %931 = vxpose.xlu0.c.b16.cont [5/8] %v907, 128
    %932 = vxpose.xlu0.c.b16.cont [6/8] %v908, 128
    %933 = vxpose.xlu0.c.b16.cont [7/8] %v909, 128
    %934 = vxpose.xlu0.c.b16.end [8/8] %v910, 128
    %v935 = vpop.trf.xlu0
    %v936 = vpop.trf.xlu0
    %v937 = vpop.trf.xlu0
    %v938 = vpop.trf.xlu0
    %v939 = vpop.trf.xlu0
    %v940 = vpop.trf.xlu0
    %v941 = vpop.trf.xlu0
    %v942 = vpop.trf.xlu0
    %943 = vmatprep.subr.bf16.mxu0 %v269
    %944 = vmatpush1.bf16.msra.mxu0 %v268
    %945 = vmatprep.subr.bf16.mxu0 %v267
    %946 = vmatpush1.bf16.msra.mxu0 %v266
    %947 = vmatprep.subr.bf16.mxu0 %v265
    %948 = vmatpush1.bf16.msra.mxu0 %v264
    %949 = vmatprep.subr.bf16.mxu0 %v263
    %950 = vmatpush1.bf16.msra.mxu0 %v262
    %951 = vmatprep.subr.bf16.mxu0 %v261
    %952 = vmatpush1.bf16.msra.mxu0 %v260
    %953 = vmatprep.subr.bf16.mxu0 %v259
    %954 = vmatpush1.bf16.msra.mxu0 %v258
    %955 = vmatprep.subr.bf16.mxu0 %v257
    %956 = vmatpush1.bf16.msra.mxu0 %v256
    %957 = vmatprep.subr.bf16.mxu0 %v255
    %958 = vmatpush1.bf16.msra.mxu0 %v254
    %959 = vmatprep.subr.bf16.mxu0 %v285
    %960 = vmatpush2.bf16.msra.mxu0 %v284
    %961 = vmatprep.subr.bf16.mxu0 %v283
    %962 = vmatpush2.bf16.msra.mxu0 %v282
    %963 = vmatprep.subr.bf16.mxu0 %v281
    %964 = vmatpush2.bf16.msra.mxu0 %v280
    %965 = vmatprep.subr.bf16.mxu0 %v279
    %966 = vmatpush2.bf16.msra.mxu0 %v278
    %967 = vmatprep.subr.bf16.mxu0 %v277
    %968 = vmatpush2.bf16.msra.mxu0 %v276
    %969 = vmatprep.subr.bf16.mxu0 %v275
    %970 = vmatpush2.bf16.msra.mxu0 %v274
    %971 = vmatprep.subr.bf16.mxu0 %v273
    %972 = vmatpush2.bf16.msra.mxu0 %v272
    %973 = vmatprep.subr.bf16.mxu0 %v271
    %974 = vmatpush2.bf16.msra.mxu0 %v270
    %975 = vmatprep.mubr.bf16.mxu0 %v935
    %976 = vmatmul.mubr.bf16.gmra.mxu0 %v919
    %v977 = vpop.f32.mrf.mxu0
    %v978 = vadd.f32 0.0, %v977
    %v979 = vpop.f32.mrf.mxu0
    %v980 = vadd.f32 0.0, %v979
    %v981 = vpop.f32.mrf.mxu0
    %v982 = vadd.f32 0.0, %v981
    %v983 = vpop.f32.mrf.mxu0
    %v984 = vadd.f32 0.0, %v983
    %985 = vmatprep.mubr.bf16.mxu0 %v936
    %986 = vmatmul.mubr.bf16.gmra.mxu0 %v920
    %v987 = vpop.f32.mrf.mxu0
    %v988 = vadd.f32 0.0, %v987
    %v989 = vpop.f32.mrf.mxu0
    %v990 = vadd.f32 0.0, %v989
    %v991 = vpop.f32.mrf.mxu0
    %v992 = vadd.f32 0.0, %v991
    %v993 = vpop.f32.mrf.mxu0
    %v994 = vadd.f32 0.0, %v993
    %995 = vmatprep.mubr.bf16.mxu0 %v937
    %996 = vmatmul.mubr.bf16.gmra.mxu0 %v921
    %v997 = vpop.f32.mrf.mxu0
    %v998 = vadd.f32 0.0, %v997
    %v999 = vpop.f32.mrf.mxu0
    %v1000 = vadd.f32 0.0, %v999
    %v1001 = vpop.f32.mrf.mxu0
    %v1002 = vadd.f32 0.0, %v1001
    %v1003 = vpop.f32.mrf.mxu0
    %v1004 = vadd.f32 0.0, %v1003
    %1005 = vmatprep.mubr.bf16.mxu0 %v938
    %1006 = vmatmul.mubr.bf16.gmra.mxu0 %v922
    %v1007 = vpop.f32.mrf.mxu0
    %v1008 = vadd.f32 0.0, %v1007
    %v1009 = vpop.f32.mrf.mxu0
    %v1010 = vadd.f32 0.0, %v1009
    %v1011 = vpop.f32.mrf.mxu0
    %v1012 = vadd.f32 0.0, %v1011
    %v1013 = vpop.f32.mrf.mxu0
    %v1014 = vadd.f32 0.0, %v1013
    %1015 = vmatprep.mubr.bf16.mxu0 %v939
    %1016 = vmatmul.mubr.bf16.gmra.mxu0 %v923
    %v1017 = vpop.f32.mrf.mxu0
    %v1018 = vadd.f32 0.0, %v1017
    %v1019 = vpop.f32.mrf.mxu0
    %v1020 = vadd.f32 0.0, %v1019
    %v1021 = vpop.f32.mrf.mxu0
    %v1022 = vadd.f32 0.0, %v1021
    %v1023 = vpop.f32.mrf.mxu0
    %v1024 = vadd.f32 0.0, %v1023
    %1025 = vmatprep.mubr.bf16.mxu0 %v940
    %1026 = vmatmul.mubr.bf16.gmra.mxu0 %v924
    %v1027 = vpop.f32.mrf.mxu0
    %v1028 = vadd.f32 0.0, %v1027
    %v1029 = vpop.f32.mrf.mxu0
    %v1030 = vadd.f32 0.0, %v1029
    %v1031 = vpop.f32.mrf.mxu0
    %v1032 = vadd.f32 0.0, %v1031
    %v1033 = vpop.f32.mrf.mxu0
    %v1034 = vadd.f32 0.0, %v1033
    %1035 = vmatprep.mubr.bf16.mxu0 %v941
    %1036 = vmatmul.mubr.bf16.gmra.mxu0 %v925
    %v1037 = vpop.f32.mrf.mxu0
    %v1038 = vadd.f32 0.0, %v1037
    %v1039 = vpop.f32.mrf.mxu0
    %v1040 = vadd.f32 0.0, %v1039
    %v1041 = vpop.f32.mrf.mxu0
    %v1042 = vadd.f32 0.0, %v1041
    %v1043 = vpop.f32.mrf.mxu0
    %v1044 = vadd.f32 0.0, %v1043
    %1045 = vmatprep.mubr.bf16.mxu0 %v942
    %1046 = vmatmul.mubr.bf16.gmra.mxu0 %v926
    %v1047 = vpop.f32.mrf.mxu0
    %v1048 = vadd.f32 0.0, %v1047
    %v1049 = vpop.f32.mrf.mxu0
    %v1050 = vadd.f32 0.0, %v1049
    %v1051 = vpop.f32.mrf.mxu0
    %v1052 = vadd.f32 0.0, %v1051
    %v1053 = vpop.f32.mrf.mxu0
    %v1054 = vadd.f32 0.0, %v1053
    %1055 = vdwg.mxu0
    %v1056 = vadd.f32 %v863, %v978
    %v1057 = vadd.f32 %v864, %v980
    %v1058 = vadd.f32 %v865, %v982
    %v1059 = vadd.f32 %v866, %v984
    %v1060 = vadd.f32 %v867, %v988
    %v1061 = vadd.f32 %v868, %v990
    %v1062 = vadd.f32 %v869, %v992
    %v1063 = vadd.f32 %v870, %v994
    %v1064 = vadd.f32 %v871, %v998
    %v1065 = vadd.f32 %v872, %v1000
    %v1066 = vadd.f32 %v873, %v1002
    %v1067 = vadd.f32 %v874, %v1004
    %v1068 = vadd.f32 %v875, %v1008
    %v1069 = vadd.f32 %v876, %v1010
    %v1070 = vadd.f32 %v877, %v1012
    %v1071 = vadd.f32 %v878, %v1014
    %v1072 = vadd.f32 %v879, %v1018
    %v1073 = vadd.f32 %v880, %v1020
    %v1074 = vadd.f32 %v881, %v1022
    %v1075 = vadd.f32 %v882, %v1024
    %v1076 = vadd.f32 %v883, %v1028
    %v1077 = vadd.f32 %v884, %v1030
    %v1078 = vadd.f32 %v885, %v1032
    %v1079 = vadd.f32 %v886, %v1034
    %v1080 = vadd.f32 %v887, %v1038
    %v1081 = vadd.f32 %v888, %v1040
    %v1082 = vadd.f32 %v889, %v1042
    %v1083 = vadd.f32 %v890, %v1044
    %v1084 = vadd.f32 %v891, %v1048
    %v1085 = vadd.f32 %v892, %v1050
    %v1086 = vadd.f32 %v893, %v1052
    %v1087 = vadd.f32 %v894, %v1054
    %1088 = vst [vmem:[#allocation7] sm:$0xff] %v1056
    %1089 = vst [vmem:[#allocation7 + $0x8] sm:$0xff] %v1057
    %1090 = vst [vmem:[#allocation7 + $0x10] sm:$0xff] %v1058
    %1091 = vst [vmem:[#allocation7 + $0x18] sm:$0xff] %v1059
    %1092 = vst [vmem:[#allocation7 + $0x20] sm:$0xff] %v1060
    %1093 = vst [vmem:[#allocation7 + $0x28] sm:$0xff] %v1061
    %1094 = vst [vmem:[#allocation7 + $0x30] sm:$0xff] %v1062
    %1095 = vst [vmem:[#allocation7 + $0x38] sm:$0xff] %v1063
    %1096 = vst [vmem:[#allocation7 + $0x40] sm:$0xff] %v1064
    %1097 = vst [vmem:[#allocation7 + $0x48] sm:$0xff] %v1065
    %1098 = vst [vmem:[#allocation7 + $0x50] sm:$0xff] %v1066
    %1099 = vst [vmem:[#allocation7 + $0x58] sm:$0xff] %v1067
    %1100 = vst [vmem:[#allocation7 + $0x60] sm:$0xff] %v1068
    %1101 = vst [vmem:[#allocation7 + $0x68] sm:$0xff] %v1069
    %1102 = vst [vmem:[#allocation7 + $0x70] sm:$0xff] %v1070
    %1103 = vst [vmem:[#allocation7 + $0x78] sm:$0xff] %v1071
    %1104 = vst [vmem:[#allocation7 + $0x80] sm:$0xff] %v1072
    %1105 = vst [vmem:[#allocation7 + $0x88] sm:$0xff] %v1073
    %1106 = vst [vmem:[#allocation7 + $0x90] sm:$0xff] %v1074
    %1107 = vst [vmem:[#allocation7 + $0x98] sm:$0xff] %v1075
    %1108 = vst [vmem:[#allocation7 + $0xa0] sm:$0xff] %v1076
    %1109 = vst [vmem:[#allocation7 + $0xa8] sm:$0xff] %v1077
    %1110 = vst [vmem:[#allocation7 + $0xb0] sm:$0xff] %v1078
    %1111 = vst [vmem:[#allocation7 + $0xb8] sm:$0xff] %v1079
    %1112 = vst [vmem:[#allocation7 + $0xc0] sm:$0xff] %v1080
    %1113 = vst [vmem:[#allocation7 + $0xc8] sm:$0xff] %v1081
    %1114 = vst [vmem:[#allocation7 + $0xd0] sm:$0xff] %v1082
    %1115 = vst [vmem:[#allocation7 + $0xd8] sm:$0xff] %v1083
    %1116 = vst [vmem:[#allocation7 + $0xe0] sm:$0xff] %v1084
    %1117 = vst [vmem:[#allocation7 + $0xe8] sm:$0xff] %v1085
    %1118 = vst [vmem:[#allocation7 + $0xf0] sm:$0xff] %v1086
    %1119 = vst [vmem:[#allocation7 + $0xf8] sm:$0xff] %v1087
    // Predicated region
    $region26: #{tpu_custom_call.1} parent=1 // pred_check
      _
    $region27: #{tpu_custom_call.1} parent=1 // pred_check_branch
      %1121 = sbr.rel (0) target = $region29
    $region28: #{tpu_custom_call.1} parent=1 // pred_region
      %s1123 = ssub.s32 4096, 4096
      %1124 = vsyncadd [#allocation4], %s1123
      %s1125 = sshll.u32 [#allocation7], 4
      %s1126 = int_to_ptr.vmem [resolvable:$true] %s1125
      %1131 = dma.vmem_to_hbm [thread:$0]  %s1126, 4096, %s3, [#allocation4], 256, 256, 16
    $region29: #{tpu_custom_call.1} parent=1 // pred_fallthru
      _
    // Predicated region
    $region30: #{tpu_custom_call.1} parent=1 // pred_check
      _
    $region31: #{tpu_custom_call.1} parent=1 // pred_check_branch
      %1133 = sbr.rel (0) target = $region33
    $region32: #{tpu_custom_call.1} parent=1 // pred_region
      %1134 = dma.done [#allocation4], 4096
    $region33: #{tpu_custom_call.1} parent=1 // pred_fallthru
      _
    %1135 = vsyncpa [#allocation3], 1
    %1136 = vsyncpa [#allocation6], 1
    %1137 = vsyncpa [#allocation4], 1

// kernel: tpu_custom_call.1
$region0: #{tpu_custom_call.1}
  #allocation0 [shape = 'u32[]', space=smem, size = 0x4, offset = 0x4, fixed_abs, tag = 'smem constant byte address 0x4 - core index']
  #allocation1 [shape = 'u32[144,128]{1,0:T(1,128)}', space=vmem, size = 0x12000, scoped, tag = 'internal scratch']
  %s0 = inlined_call_operand.hbm [shape: bf16[256,256], index: 0, kind: input, shape index: {}]
  %s1 = inlined_call_operand.hbm [shape: bf16[256,128], index: 1, kind: input, shape index: {}]
  %s2 = inlined_call_operand.vmem [shape: f32[1,128], index: 2, kind: input, shape index: {}]
  %s3 = inlined_call_operand.hbm [shape: f32[1,128,256], index: 3, kind: output, shape index: {}]
  %s4 = sld [smem:[#allocation0]]
  $region34: #{tpu_custom_call.1} parent=0
    _
  %s6 = ssub.s32 1, %s4
  %s7 = scalar_select 0, %s6, %s4
  $region1: #{tpu_custom_call.1} parent=0
    #allocation2 [shape = 'u8[131072]{0}', space=vmem, size = 0x20000, scoped, tag = 'input window, operand 0, single buffered']
    #allocation3 [shape = 's32[1]{0}', space=sflag, size = 0x4, scoped, tag = 'scoped memory for tpu_custom_call.1']
    #allocation4 [shape = 's32[1]{0}', space=sflag, size = 0x4, scoped, tag = 'scoped memory for tpu_custom_call.1']
    #allocation5 [shape = 'u8[65536]{0}', space=vmem, size = 0x10000, scoped, tag = 'input window, operand 1, single buffered']
    #allocation6 [shape = 's32[1]{0}', space=sflag, size = 0x4, scoped, tag = 'scoped memory for tpu_custom_call.1']
    #allocation7 [shape = 'u8[131072]{0}', space=vmem, size = 0x20000, scoped, tag = 'output window, operand 0, single buffered']
    %8 = vsyncpa [#allocation3], 0
    %9 = vsyncpa [#allocation6], 0
    %10 = vsyncpa [#allocation4], 0
    // Predicated region
    $region2: #{tpu_custom_call.1} parent=1 // pred_check
      _
    $region3: #{tpu_custom_call.1} parent=1 // pred_check_branch
      %12 = sbr.rel (0) target = $region5
    $region4: #{tpu_custom_call.1} parent=1 // pred_region
      %s13 = sadd.s32 0, 0
      %s14 = smul.u32 32, %s13
      %s16 = ssub.s32 4096, 4096
      %17 = vsyncadd [#allocation3], %s16
      %s18 = smul.addr %s14, 2
      %s19 = smul.addr %s18, 64
      %s20 = scalar_lea.hbm %s0, %s19
      %s21 = sshll.u32 [#allocation2], 4
      %s22 = int_to_ptr.vmem [resolvable:$true] %s21
      %27 = dma.hbm_to_vmem [thread:$0]  %s20, 4096, %s22, [#allocation3], 128, 128, 8
    $region5: #{tpu_custom_call.1} parent=1 // pred_fallthru
      _
    // Predicated region
    $region6: #{tpu_custom_call.1} parent=1 // pred_check
      _
    $region7: #{tpu_custom_call.1} parent=1 // pred_check_branch
      %29 = sbr.rel (0) target = $region9
    $region8: #{tpu_custom_call.1} parent=1 // pred_region
      %s31 = ssub.s32 2048, 2048
      %32 = vsyncadd [#allocation6], %s31
      %s33 = sshll.u32 [#allocation5], 4
      %s34 = int_to_ptr.vmem [resolvable:$true] %s33
      %39 = dma.hbm_to_vmem [thread:$0]  %s1, 2048, %s34, [#allocation6], 64, 64, 4
    $region9: #{tpu_custom_call.1} parent=1 // pred_fallthru
      _
    // Predicated region
    $region10: #{tpu_custom_call.1} parent=1 // pred_check
      _
    $region11: #{tpu_custom_call.1} parent=1 // pred_check_branch
      %41 = sbr.rel (0) target = $region13
    $region12: #{tpu_custom_call.1} parent=1 // pred_region
      _
    $region13: #{tpu_custom_call.1} parent=1 // pred_fallthru
      _
    // Predicated region
    $region14: #{tpu_custom_call.1} parent=1 // pred_check
      _
    $region15: #{tpu_custom_call.1} parent=1 // pred_check_branch
      %43 = sbr.rel (0) target = $region17
    $region16: #{tpu_custom_call.1} parent=1 // pred_region
      %44 = dma.done [#allocation3], 4096
    $region17: #{tpu_custom_call.1} parent=1 // pred_fallthru
      _
    // Predicated region
    $region18: #{tpu_custom_call.1} parent=1 // pred_check
      _
    $region19: #{tpu_custom_call.1} parent=1 // pred_check_branch
      %46 = sbr.rel (0) target = $region21
    $region20: #{tpu_custom_call.1} parent=1 // pred_region
      %47 = dma.done [#allocation6], 2048
    $region21: #{tpu_custom_call.1} parent=1 // pred_fallthru
      _
    %s48 = sadd.s32 0, 0
    %s49 = smul.u32 32, %s48
    %p51 = scmp.eq.s32.totalorder 0, 0
    // Predicated region
    $region22: #{tpu_custom_call.1} parent=1 // pred_check
      %p52 = pneg %p51
    $region23: #{tpu_custom_call.1} parent=1 // pred_check_branch
      %54 = sbr.rel (%p52) target = $region25
    $region24: #{tpu_custom_call.1} parent=1 // pred_region
      %55 = vst [vmem:[#allocation7] sm:$0xff] 0.0
      %56 = vst [vmem:[#allocation7 + $0x8] sm:$0xff] 0.0
      %57 = vst [vmem:[#allocation7 + $0x10] sm:$0xff] 0.0
      %58 = vst [vmem:[#allocation7 + $0x18] sm:$0xff] 0.0
      %59 = vst [vmem:[#allocation7 + $0x20] sm:$0xff] 0.0
      %60 = vst [vmem:[#allocation7 + $0x28] sm:$0xff] 0.0
      %61 = vst [vmem:[#allocation7 + $0x30] sm:$0xff] 0.0
      %62 = vst [vmem:[#allocation7 + $0x38] sm:$0xff] 0.0
      %63 = vst [vmem:[#allocation7 + $0x40] sm:$0xff] 0.0
      %64 = vst [vmem:[#allocation7 + $0x48] sm:$0xff] 0.0
      %65 = vst [vmem:[#allocation7 + $0x50] sm:$0xff] 0.0
      %66 = vst [vmem:[#allocation7 + $0x58] sm:$0xff] 0.0
      %67 = vst [vmem:[#allocation7 + $0x60] sm:$0xff] 0.0
      %68 = vst [vmem:[#allocation7 + $0x68] sm:$0xff] 0.0
      %69 = vst [vmem:[#allocation7 + $0x70] sm:$0xff] 0.0
      %70 = vst [vmem:[#allocation7 + $0x78] sm:$0xff] 0.0
      %71 = vst [vmem:[#allocation7 + $0x80] sm:$0xff] 0.0
      %72 = vst [vmem:[#allocation7 + $0x88] sm:$0xff] 0.0
      %73 = vst [vmem:[#allocation7 + $0x90] sm:$0xff] 0.0
      %74 = vst [vmem:[#allocation7 + $0x98] sm:$0xff] 0.0
      %75 = vst [vmem:[#allocation7 + $0xa0] sm:$0xff] 0.0
      %76 = vst [vmem:[#allocation7 + $0xa8] sm:$0xff] 0.0
      %77 = vst [vmem:[#allocation7 + $0xb0] sm:$0xff] 0.0
      %78 = vst [vmem:[#allocation7 + $0xb8] sm:$0xff] 0.0
      %79 = vst [vmem:[#allocation7 + $0xc0] sm:$0xff] 0.0
      %80 = vst [vmem:[#allocation7 + $0xc8] sm:$0xff] 0.0
      %81 = vst [vmem:[#allocation7 + $0xd0] sm:$0xff] 0.0
      %82 = vst [vmem:[#allocation7 + $0xd8] sm:$0xff] 0.0
      %83 = vst [vmem:[#allocation7 + $0xe0] sm:$0xff] 0.0
      %84 = vst [vmem:[#allocation7 + $0xe8] sm:$0xff] 0.0
      %85 = vst [vmem:[#allocation7 + $0xf0] sm:$0xff] 0.0
      %86 = vst [vmem:[#allocation7 + $0xf8] sm:$0xff] 0.0
    $region25: #{tpu_custom_call.1} parent=1 // pred_fallthru
      _
    %v87 = vld [vmem:[#allocation2] sm:$0xff]
    %v88 = vld [vmem:[#allocation2 + $0x8] sm:$0xff]
    %v89 = vld [vmem:[#allocation2 + $0x10] sm:$0xff]
    %v90 = vld [vmem:[#allocation2 + $0x18] sm:$0xff]
    %v91 = vld [vmem:[#allocation2 + $0x20] sm:$0xff]
    %v92 = vld [vmem:[#allocation2 + $0x28] sm:$0xff]
    %v93 = vld [vmem:[#allocation2 + $0x30] sm:$0xff]
    %v94 = vld [vmem:[#allocation2 + $0x38] sm:$0xff]
    %v95 = vld [vmem:[#allocation2 + $0x40] sm:$0xff]
    %v96 = vld [vmem:[#allocation2 + $0x48] sm:$0xff]
    %v97 = vld [vmem:[#allocation2 + $0x50] sm:$0xff]
    %v98 = vld [vmem:[#allocation2 + $0x58] sm:$0xff]
    %v99 = vld [vmem:[#allocation2 + $0x60] sm:$0xff]
    %v100 = vld [vmem:[#allocation2 + $0x68] sm:$0xff]
    %v101 = vld [vmem:[#allocation2 + $0x70] sm:$0xff]
    %v102 = vld [vmem:[#allocation2 + $0x78] sm:$0xff]
    %v103 = vld [vmem:[#allocation2 + $0x80] sm:$0xff]
    %v104 = vld [vmem:[#allocation2 + $0x88] sm:$0xff]
    %v105 = vld [vmem:[#allocation2 + $0x90] sm:$0xff]
    %v106 = vld [vmem:[#allocation2 + $0x98] sm:$0xff]
    %v107 = vld [vmem:[#allocation2 + $0xa0] sm:$0xff]
    %v108 = vld [vmem:[#allocation2 + $0xa8] sm:$0xff]
    %v109 = vld [vmem:[#allocation2 + $0xb0] sm:$0xff]
    %v110 = vld [vmem:[#allocation2 + $0xb8] sm:$0xff]
    %v111 = vld [vmem:[#allocation2 + $0xc0] sm:$0xff]
    %v112 = vld [vmem:[#allocation2 + $0xc8] sm:$0xff]
    %v113 = vld [vmem:[#allocation2 + $0xd0] sm:$0xff]
    %v114 = vld [vmem:[#allocation2 + $0xd8] sm:$0xff]
    %v115 = vld [vmem:[#allocation2 + $0xe0] sm:$0xff]
    %v116 = vld [vmem:[#allocation2 + $0xe8] sm:$0xff]
    %v117 = vld [vmem:[#allocation2 + $0xf0] sm:$0xff]
    %v118 = vld [vmem:[#allocation2 + $0xf8] sm:$0xff]
    %v119 = vld [vmem:[#allocation5] sm:$0xf]
    %v120 = vld [vmem:[#allocation5 + $0x4] sm:$0xf]
    %v121 = vld [vmem:[#allocation5 + $0x8] sm:$0xf]
    %v122 = vld [vmem:[#allocation5 + $0xc] sm:$0xf]
    %v123 = vld [vmem:[#allocation5 + $0x10] sm:$0xf]
    %v124 = vld [vmem:[#allocation5 + $0x14] sm:$0xf]
    %v125 = vld [vmem:[#allocation5 + $0x18] sm:$0xf]
    %v126 = vld [vmem:[#allocation5 + $0x1c] sm:$0xf]
    %v127 = vld [vmem:[#allocation5 + $0x20] sm:$0xf]
    %v128 = vld [vmem:[#allocation5 + $0x24] sm:$0xf]
    %v129 = vld [vmem:[#allocation5 + $0x28] sm:$0xf]
    %v130 = vld [vmem:[#allocation5 + $0x2c] sm:$0xf]
    %v131 = vld [vmem:[#allocation5 + $0x30] sm:$0xf]
    %v132 = vld [vmem:[#allocation5 + $0x34] sm:$0xf]
    %v133 = vld [vmem:[#allocation5 + $0x38] sm:$0xf]
    %v134 = vld [vmem:[#allocation5 + $0x3c] sm:$0xf]
    %v135 = vld [vmem:[#allocation5 + $0x40] sm:$0xf]
    %v136 = vld [vmem:[#allocation5 + $0x44] sm:$0xf]
    %v137 = vld [vmem:[#allocation5 + $0x48] sm:$0xf]
    %v138 = vld [vmem:[#allocation5 + $0x4c] sm:$0xf]
    %v139 = vld [vmem:[#allocation5 + $0x50] sm:$0xf]
    %v140 = vld [vmem:[#allocation5 + $0x54] sm:$0xf]
    %v141 = vld [vmem:[#allocation5 + $0x58] sm:$0xf]
    %v142 = vld [vmem:[#allocation5 + $0x5c] sm:$0xf]
    %v143 = vld [vmem:[#allocation5 + $0x60] sm:$0xf]
    %v144 = vld [vmem:[#allocation5 + $0x64] sm:$0xf]
    %v145 = vld [vmem:[#allocation5 + $0x68] sm:$0xf]
    %v146 = vld [vmem:[#allocation5 + $0x6c] sm:$0xf]
    %v147 = vld [vmem:[#allocation5 + $0x70] sm:$0xf]
    %v148 = vld [vmem:[#allocation5 + $0x74] sm:$0xf]
    %v149 = vld [vmem:[#allocation5 + $0x78] sm:$0xf]
    %v150 = vld [vmem:[#allocation5 + $0x7c] sm:$0xf]
    %v151 = vld [vmem:[%s2] sm:$0x1]
    %v153 = vlaneseq
    %v154 = vshrl.u32 %v153, 7
    %v155 = vsub.s32 0, %v154
    %v156 = vrot.slane %v151, %v155
    %v190 = vunpack.c.l.b16 %v87
    %v191 = vunpack.c.h.b16 %v87
    %v192 = vunpack.c.l.b16 %v88
    %v193 = vunpack.c.h.b16 %v88
    %v194 = vunpack.c.l.b16 %v89
    %v195 = vunpack.c.h.b16 %v89
    %v196 = vunpack.c.l.b16 %v90
    %v197 = vunpack.c.h.b16 %v90
    %v198 = vunpack.c.l.b16 %v91
    %v199 = vunpack.c.h.b16 %v91
    %v200 = vunpack.c.l.b16 %v92
    %v201 = vunpack.c.h.b16 %v92
    %v202 = vunpack.c.l.b16 %v93
    %v203 = vunpack.c.h.b16 %v93
    %v204 = vunpack.c.l.b16 %v94
    %v205 = vunpack.c.h.b16 %v94
    %v206 = vunpack.c.l.b16 %v95
    %v207 = vunpack.c.h.b16 %v95
    %v208 = vunpack.c.l.b16 %v96
    %v209 = vunpack.c.h.b16 %v96
    %v210 = vunpack.c.l.b16 %v97
    %v211 = vunpack.c.h.b16 %v97
    %v212 = vunpack.c.l.b16 %v98
    %v213 = vunpack.c.h.b16 %v98
    %v214 = vunpack.c.l.b16 %v99
    %v215 = vunpack.c.h.b16 %v99
    %v216 = vunpack.c.l.b16 %v100
    %v217 = vunpack.c.h.b16 %v100
    %v218 = vunpack.c.l.b16 %v101
    %v219 = vunpack.c.h.b16 %v101
    %v220 = vunpack.c.l.b16 %v102
    %v221 = vunpack.c.h.b16 %v102
    %v222 = vunpack.c.l.b16 %v103
    %v223 = vunpack.c.h.b16 %v103
    %v224 = vunpack.c.l.b16 %v104
    %v225 = vunpack.c.h.b16 %v104
    %v226 = vunpack.c.l.b16 %v105
    %v227 = vunpack.c.h.b16 %v105
    %v228 = vunpack.c.l.b16 %v106
    %v229 = vunpack.c.h.b16 %v106
    %v230 = vunpack.c.l.b16 %v107
    %v231 = vunpack.c.h.b16 %v107
    %v232 = vunpack.c.l.b16 %v108
    %v233 = vunpack.c.h.b16 %v108
    %v234 = vunpack.c.l.b16 %v109
    %v235 = vunpack.c.h.b16 %v109
    %v236 = vunpack.c.l.b16 %v110
    %v237 = vunpack.c.h.b16 %v110
    %v238 = vunpack.c.l.b16 %v111
    %v239 = vunpack.c.h.b16 %v111
    %v240 = vunpack.c.l.b16 %v112
    %v241 = vunpack.c.h.b16 %v112
    %v242 = vunpack.c.l.b16 %v113
    %v243 = vunpack.c.h.b16 %v113
    %v244 = vunpack.c.l.b16 %v114
    %v245 = vunpack.c.h.b16 %v114
    %v246 = vunpack.c.l.b16 %v115
    %v247 = vunpack.c.h.b16 %v115
    %v248 = vunpack.c.l.b16 %v116
    %v249 = vunpack.c.h.b16 %v116
    %v250 = vunpack.c.l.b16 %v117
    %v251 = vunpack.c.h.b16 %v117
    %v252 = vunpack.c.l.b16 %v118
    %v253 = vunpack.c.h.b16 %v118
    %v254 = vpack.c.b16 %v192, %v190
    %v255 = vpack.c.b16 %v193, %v191
    %v256 = vpack.c.b16 %v196, %v194
    %v257 = vpack.c.b16 %v197, %v195
    %v258 = vpack.c.b16 %v200, %v198
    %v259 = vpack.c.b16 %v201, %v199
    %v260 = vpack.c.b16 %v204, %v202
    %v261 = vpack.c.b16 %v205, %v203
    %v262 = vpack.c.b16 %v208, %v206
    %v263 = vpack.c.b16 %v209, %v207
    %v264 = vpack.c.b16 %v212, %v210
    %v265 = vpack.c.b16 %v213, %v211
    %v266 = vpack.c.b16 %v216, %v214
    %v267 = vpack.c.b16 %v217, %v215
    %v268 = vpack.c.b16 %v220, %v218
    %v269 = vpack.c.b16 %v221, %v219
    %v270 = vpack.c.b16 %v224, %v222
    %v271 = vpack.c.b16 %v225, %v223
    %v272 = vpack.c.b16 %v228, %v226
    %v273 = vpack.c.b16 %v229, %v227
    %v274 = vpack.c.b16 %v232, %v230
    %v275 = vpack.c.b16 %v233, %v231
    %v276 = vpack.c.b16 %v236, %v234
    %v277 = vpack.c.b16 %v237, %v235
    %v278 = vpack.c.b16 %v240, %v238
    %v279 = vpack.c.b16 %v241, %v239
    %v280 = vpack.c.b16 %v244, %v242
    %v281 = vpack.c.b16 %v245, %v243
    %v282 = vpack.c.b16 %v248, %v246
    %v283 = vpack.c.b16 %v249, %v247
    %v284 = vpack.c.b16 %v252, %v250
    %v285 = vpack.c.b16 %v253, %v251
    %v350 = vunpack.c.l.b16 %v119
    %v351 = vunpack.c.l.b16 %v120
    %v352 = vunpack.c.l.b16 %v121
    %v353 = vunpack.c.l.b16 %v122
    %v354 = vunpack.c.l.b16 %v123
    %v355 = vunpack.c.l.b16 %v124
    %v356 = vunpack.c.l.b16 %v125
    %v357 = vunpack.c.l.b16 %v126
    %v358 = vunpack.c.l.b16 %v127
    %v359 = vunpack.c.l.b16 %v128
    %v360 = vunpack.c.l.b16 %v129
    %v361 = vunpack.c.l.b16 %v130
    %v362 = vunpack.c.l.b16 %v131
    %v363 = vunpack.c.l.b16 %v132
    %v364 = vunpack.c.l.b16 %v133
    %v365 = vunpack.c.l.b16 %v134
    %v366 = vunpack.c.l.b16 %v135
    %v367 = vunpack.c.l.b16 %v136
    %v368 = vunpack.c.l.b16 %v137
    %v369 = vunpack.c.l.b16 %v138
    %v370 = vunpack.c.l.b16 %v139
    %v371 = vunpack.c.l.b16 %v140
    %v372 = vunpack.c.l.b16 %v141
    %v373 = vunpack.c.l.b16 %v142
    %v374 = vunpack.c.l.b16 %v143
    %v375 = vunpack.c.l.b16 %v144
    %v376 = vunpack.c.l.b16 %v145
    %v377 = vunpack.c.l.b16 %v146
    %v378 = vunpack.c.l.b16 %v147
    %v379 = vunpack.c.l.b16 %v148
    %v380 = vunpack.c.l.b16 %v149
    %v381 = vunpack.c.l.b16 %v150
    %v382 = vpack.c.b16 %v351, %v350
    %v383 = vpack.c.b16 %v353, %v352
    %v384 = vpack.c.b16 %v355, %v354
    %v385 = vpack.c.b16 %v357, %v356
    %v386 = vpack.c.b16 %v359, %v358
    %v387 = vpack.c.b16 %v361, %v360
    %v388 = vpack.c.b16 %v363, %v362
    %v389 = vpack.c.b16 %v365, %v364
    %v390 = vpack.c.b16 %v367, %v366
    %v391 = vpack.c.b16 %v369, %v368
    %v392 = vpack.c.b16 %v371, %v370
    %v393 = vpack.c.b16 %v373, %v372
    %v394 = vpack.c.b16 %v375, %v374
    %v395 = vpack.c.b16 %v377, %v376
    %v396 = vpack.c.b16 %v379, %v378
    %v397 = vpack.c.b16 %v381, %v380
    %414 = vmatprep.subr.bf16.mxu0 0
    %415 = vmatpush1.bf16.msra.mxu0 %v389
    %416 = vmatprep.subr.bf16.mxu0 0
    %417 = vmatpush1.bf16.msra.mxu0 %v388
    %418 = vmatprep.subr.bf16.mxu0 0
    %419 = vmatpush1.bf16.msra.mxu0 %v387
    %420 = vmatprep.subr.bf16.mxu0 0
    %421 = vmatpush1.bf16.msra.mxu0 %v386
    %422 = vmatprep.subr.bf16.mxu0 0
    %423 = vmatpush1.bf16.msra.mxu0 %v385
    %424 = vmatprep.subr.bf16.mxu0 0
    %425 = vmatpush1.bf16.msra.mxu0 %v384
    %426 = vmatprep.subr.bf16.mxu0 0
    %427 = vmatpush1.bf16.msra.mxu0 %v383
    %428 = vmatprep.subr.bf16.mxu0 0
    %429 = vmatpush1.bf16.msra.mxu0 %v382
    %430 = vmatprep.subr.bf16.mxu0 0
    %431 = vmatpush2.bf16.msra.mxu0 %v397
    %432 = vmatprep.subr.bf16.mxu0 0
    %433 = vmatpush2.bf16.msra.mxu0 %v396
    %434 = vmatprep.subr.bf16.mxu0 0
    %435 = vmatpush2.bf16.msra.mxu0 %v395
    %436 = vmatprep.subr.bf16.mxu0 0
    %437 = vmatpush2.bf16.msra.mxu0 %v394
    %438 = vmatprep.subr.bf16.mxu0 0
    %439 = vmatpush2.bf16.msra.mxu0 %v393
    %440 = vmatprep.subr.bf16.mxu0 0
    %441 = vmatpush2.bf16.msra.mxu0 %v392
    %442 = vmatprep.subr.bf16.mxu0 0
    %443 = vmatpush2.bf16.msra.mxu0 %v391
    %444 = vmatprep.subr.bf16.mxu0 0
    %445 = vmatpush2.bf16.msra.mxu0 %v390
    %446 = vmatprep.mubr.bf16.mxu0 %v255
    %447 = vmatmul.mubr.bf16.gmra.mxu0 %v254
    %v448 = vpop.f32.mrf.mxu0
    %v449 = vadd.f32 %v156, %v448
    %v450 = vpop.f32.mrf.mxu0
    %v451 = vpop.f32.mrf.mxu0
    %v452 = vadd.f32 %v156, %v451
    %v453 = vpop.f32.mrf.mxu0
    %454 = vmatprep.mubr.bf16.mxu0 %v257
    %455 = vmatmul.mubr.bf16.gmra.mxu0 %v256
    %v456 = vpop.f32.mrf.mxu0
    %v457 = vadd.f32 %v156, %v456
    %v458 = vpop.f32.mrf.mxu0
    %v459 = vpop.f32.mrf.mxu0
    %v460 = vadd.f32 %v156, %v459
    %v461 = vpop.f32.mrf.mxu0
    %462 = vmatprep.mubr.bf16.mxu0 %v259
    %463 = vmatmul.mubr.bf16.gmra.mxu0 %v258
    %v464 = vpop.f32.mrf.mxu0
    %v465 = vadd.f32 %v156, %v464
    %v466 = vpop.f32.mrf.mxu0
    %v467 = vpop.f32.mrf.mxu0
    %v468 = vadd.f32 %v156, %v467
    %v469 = vpop.f32.mrf.mxu0
    %470 = vmatprep.mubr.bf16.mxu0 %v261
    %471 = vmatmul.mubr.bf16.gmra.mxu0 %v260
    %v472 = vpop.f32.mrf.mxu0
    %v473 = vadd.f32 %v156, %v472
    %v474 = vpop.f32.mrf.mxu0
    %v475 = vpop.f32.mrf.mxu0
    %v476 = vadd.f32 %v156, %v475
    %v477 = vpop.f32.mrf.mxu0
    %478 = vmatprep.mubr.bf16.mxu0 %v263
    %479 = vmatmul.mubr.bf16.gmra.mxu0 %v262
    %v480 = vpop.f32.mrf.mxu0
    %v481 = vadd.f32 %v156, %v480
    %v482 = vpop.f32.mrf.mxu0
    %v483 = vpop.f32.mrf.mxu0
    %v484 = vadd.f32 %v156, %v483
    %v485 = vpop.f32.mrf.mxu0
    %486 = vmatprep.mubr.bf16.mxu0 %v265
    %487 = vmatmul.mubr.bf16.gmra.mxu0 %v264
    %v488 = vpop.f32.mrf.mxu0
    %v489 = vadd.f32 %v156, %v488
    %v490 = vpop.f32.mrf.mxu0
    %v491 = vpop.f32.mrf.mxu0
    %v492 = vadd.f32 %v156, %v491
    %v493 = vpop.f32.mrf.mxu0
    %494 = vmatprep.mubr.bf16.mxu0 %v267
    %495 = vmatmul.mubr.bf16.gmra.mxu0 %v266
    %v496 = vpop.f32.mrf.mxu0
    %v497 = vadd.f32 %v156, %v496
    %v498 = vpop.f32.mrf.mxu0
    %v499 = vpop.f32.mrf.mxu0
    %v500 = vadd.f32 %v156, %v499
    %v501 = vpop.f32.mrf.mxu0
    %502 = vmatprep.mubr.bf16.mxu0 %v269
    %503 = vmatmul.mubr.bf16.gmra.mxu0 %v268
    %v504 = vpop.f32.mrf.mxu0
    %v505 = vadd.f32 %v156, %v504
    %v506 = vpop.f32.mrf.mxu0
    %v507 = vpop.f32.mrf.mxu0
    %v508 = vadd.f32 %v156, %v507
    %v509 = vpop.f32.mrf.mxu0
    %510 = vmatprep.mubr.bf16.mxu0 %v271
    %511 = vmatmul.mubr.bf16.gmra.mxu0 %v270
    %v512 = vpop.f32.mrf.mxu0
    %v513 = vadd.f32 %v156, %v512
    %v514 = vpop.f32.mrf.mxu0
    %v515 = vpop.f32.mrf.mxu0
    %v516 = vadd.f32 %v156, %v515
    %v517 = vpop.f32.mrf.mxu0
    %518 = vmatprep.mubr.bf16.mxu0 %v273
    %519 = vmatmul.mubr.bf16.gmra.mxu0 %v272
    %v520 = vpop.f32.mrf.mxu0
    %v521 = vadd.f32 %v156, %v520
    %v522 = vpop.f32.mrf.mxu0
    %v523 = vpop.f32.mrf.mxu0
    %v524 = vadd.f32 %v156, %v523
    %v525 = vpop.f32.mrf.mxu0
    %526 = vmatprep.mubr.bf16.mxu0 %v275
    %527 = vmatmul.mubr.bf16.gmra.mxu0 %v274
    %v528 = vpop.f32.mrf.mxu0
    %v529 = vadd.f32 %v156, %v528
    %v530 = vpop.f32.mrf.mxu0
    %v531 = vpop.f32.mrf.mxu0
    %v532 = vadd.f32 %v156, %v531
    %v533 = vpop.f32.mrf.mxu0
    %534 = vmatprep.mubr.bf16.mxu0 %v277
    %535 = vmatmul.mubr.bf16.gmra.mxu0 %v276
    %v536 = vpop.f32.mrf.mxu0
    %v537 = vadd.f32 %v156, %v536
    %v538 = vpop.f32.mrf.mxu0
    %v539 = vpop.f32.mrf.mxu0
    %v540 = vadd.f32 %v156, %v539
    %v541 = vpop.f32.mrf.mxu0
    %542 = vmatprep.mubr.bf16.mxu0 %v279
    %543 = vmatmul.mubr.bf16.gmra.mxu0 %v278
    %v544 = vpop.f32.mrf.mxu0
    %v545 = vadd.f32 %v156, %v544
    %v546 = vpop.f32.mrf.mxu0
    %v547 = vpop.f32.mrf.mxu0
    %v548 = vadd.f32 %v156, %v547
    %v549 = vpop.f32.mrf.mxu0
    %550 = vmatprep.mubr.bf16.mxu0 %v281
    %551 = vmatmul.mubr.bf16.gmra.mxu0 %v280
    %v552 = vpop.f32.mrf.mxu0
    %v553 = vadd.f32 %v156, %v552
    %v554 = vpop.f32.mrf.mxu0
    %v555 = vpop.f32.mrf.mxu0
    %v556 = vadd.f32 %v156, %v555
    %v557 = vpop.f32.mrf.mxu0
    %558 = vmatprep.mubr.bf16.mxu0 %v283
    %559 = vmatmul.mubr.bf16.gmra.mxu0 %v282
    %v560 = vpop.f32.mrf.mxu0
    %v561 = vadd.f32 %v156, %v560
    %v562 = vpop.f32.mrf.mxu0
    %v563 = vpop.f32.mrf.mxu0
    %v564 = vadd.f32 %v156, %v563
    %v565 = vpop.f32.mrf.mxu0
    %566 = vmatprep.mubr.bf16.mxu0 %v285
    %567 = vmatmul.mubr.bf16.gmra.mxu0 %v284
    %v568 = vpop.f32.mrf.mxu0
    %v569 = vadd.f32 %v156, %v568
    %v570 = vpop.f32.mrf.mxu0
    %v571 = vpop.f32.mrf.mxu0
    %v572 = vadd.f32 %v156, %v571
    %v573 = vpop.f32.mrf.mxu0
    %574 = vdwg.mxu0
    %575 = vmax.xlane.f32.xlu0 %v449
    %v576 = vpop.xlane.xlu0 %575
    %577 = vmax.xlane.f32.xlu0 %v452
    %v578 = vpop.xlane.xlu0 %577
    %579 = vmax.xlane.f32.xlu0 %v457
    %v580 = vpop.xlane.xlu0 %579
    %581 = vmax.xlane.f32.xlu0 %v460
    %v582 = vpop.xlane.xlu0 %581
    %583 = vmax.xlane.f32.xlu0 %v465
    %v584 = vpop.xlane.xlu0 %583
    %585 = vmax.xlane.f32.xlu0 %v468
    %v586 = vpop.xlane.xlu0 %585
    %587 = vmax.xlane.f32.xlu0 %v473
    %v588 = vpop.xlane.xlu0 %587
    %589 = vmax.xlane.f32.xlu0 %v476
    %v590 = vpop.xlane.xlu0 %589
    %591 = vmax.xlane.f32.xlu0 %v481
    %v592 = vpop.xlane.xlu0 %591
    %593 = vmax.xlane.f32.xlu0 %v484
    %v594 = vpop.xlane.xlu0 %593
    %595 = vmax.xlane.f32.xlu0 %v489
    %v596 = vpop.xlane.xlu0 %595
    %597 = vmax.xlane.f32.xlu0 %v492
    %v598 = vpop.xlane.xlu0 %597
    %599 = vmax.xlane.f32.xlu0 %v497
    %v600 = vpop.xlane.xlu0 %599
    %601 = vmax.xlane.f32.xlu0 %v500
    %v602 = vpop.xlane.xlu0 %601
    %603 = vmax.xlane.f32.xlu0 %v505
    %v604 = vpop.xlane.xlu0 %603
    %605 = vmax.xlane.f32.xlu0 %v508
    %v606 = vpop.xlane.xlu0 %605
    %607 = vmax.xlane.f32.xlu0 %v513
    %v608 = vpop.xlane.xlu0 %607
    %609 = vmax.xlane.f32.xlu0 %v516
    %v610 = vpop.xlane.xlu0 %609
    %611 = vmax.xlane.f32.xlu0 %v521
    %v612 = vpop.xlane.xlu0 %611
    %613 = vmax.xlane.f32.xlu0 %v524
    %v614 = vpop.xlane.xlu0 %613
    %615 = vmax.xlane.f32.xlu0 %v529
    %v616 = vpop.xlane.xlu0 %615
    %617 = vmax.xlane.f32.xlu0 %v532
    %v618 = vpop.xlane.xlu0 %617
    %619 = vmax.xlane.f32.xlu0 %v537
    %v620 = vpop.xlane.xlu0 %619
    %621 = vmax.xlane.f32.xlu0 %v540
    %v622 = vpop.xlane.xlu0 %621
    %623 = vmax.xlane.f32.xlu0 %v545
    %v624 = vpop.xlane.xlu0 %623
    %625 = vmax.xlane.f32.xlu0 %v548
    %v626 = vpop.xlane.xlu0 %625
    %627 = vmax.xlane.f32.xlu0 %v553
    %v628 = vpop.xlane.xlu0 %627
    %629 = vmax.xlane.f32.xlu0 %v556
    %v630 = vpop.xlane.xlu0 %629
    %631 = vmax.xlane.f32.xlu0 %v561
    %v632 = vpop.xlane.xlu0 %631
    %633 = vmax.xlane.f32.xlu0 %v564
    %v634 = vpop.xlane.xlu0 %633
    %635 = vmax.xlane.f32.xlu0 %v569
    %v636 = vpop.xlane.xlu0 %635
    %637 = vmax.xlane.f32.xlu0 %v572
    %v638 = vpop.xlane.xlu0 %637
    %v639 = vsub.f32 %v449, %v576
    %v640 = vsub.f32 %v452, %v578
    %v641 = vsub.f32 %v457, %v580
    %v642 = vsub.f32 %v460, %v582
    %v643 = vsub.f32 %v465, %v584
    %v644 = vsub.f32 %v468, %v586
    %v645 = vsub.f32 %v473, %v588
    %v646 = vsub.f32 %v476, %v590
    %v647 = vsub.f32 %v481, %v592
    %v648 = vsub.f32 %v484, %v594
    %v649 = vsub.f32 %v489, %v596
    %v650 = vsub.f32 %v492, %v598
    %v651 = vsub.f32 %v497, %v600
    %v652 = vsub.f32 %v500, %v602
    %v653 = vsub.f32 %v505, %v604
    %v654 = vsub.f32 %v508, %v606
    %v655 = vsub.f32 %v513, %v608
    %v656 = vsub.f32 %v516, %v610
    %v657 = vsub.f32 %v521, %v612
    %v658 = vsub.f32 %v524, %v614
    %v659 = vsub.f32 %v529, %v616
    %v660 = vsub.f32 %v532, %v618
    %v661 = vsub.f32 %v537, %v620
    %v662 = vsub.f32 %v540, %v622
    %v663 = vsub.f32 %v545, %v624
    %v664 = vsub.f32 %v548, %v626
    %v665 = vsub.f32 %v553, %v628
    %v666 = vsub.f32 %v556, %v630
    %v667 = vsub.f32 %v561, %v632
    %v668 = vsub.f32 %v564, %v634
    %v669 = vsub.f32 %v569, %v636
    %v670 = vsub.f32 %v572, %v638
    %v671 = vmul.f32 %v639, 1.442695
    %v672 = vpow.pop %v671
    %v673 = vmul.f32 %v640, 1.442695
    %v674 = vpow.pop %v673
    %v675 = vmul.f32 %v641, 1.442695
    %v676 = vpow.pop %v675
    %v677 = vmul.f32 %v642, 1.442695
    %v678 = vpow.pop %v677
    %v679 = vmul.f32 %v643, 1.442695
    %v680 = vpow.pop %v679
    %v681 = vmul.f32 %v644, 1.442695
    %v682 = vpow.pop %v681
    %v683 = vmul.f32 %v645, 1.442695
    %v684 = vpow.pop %v683
    %v685 = vmul.f32 %v646, 1.442695
    %v686 = vpow.pop %v685
    %v687 = vmul.f32 %v647, 1.442695
    %v688 = vpow.pop %v687
    %v689 = vmul.f32 %v648, 1.442695
    %v690 = vpow.pop %v689
    %v691 = vmul.f32 %v649, 1.442695
    %v692 = vpow.pop %v691
    %v693 = vmul.f32 %v650, 1.442695
    %v694 = vpow.pop %v693
    %v695 = vmul.f32 %v651, 1.442695
    %v696 = vpow.pop %v695
    %v697 = vmul.f32 %v652, 1.442695
    %v698 = vpow.pop %v697
    %v699 = vmul.f32 %v653, 1.442695
    %v700 = vpow.pop %v699
    %v701 = vmul.f32 %v654, 1.442695
    %v702 = vpow.pop %v701
    %v703 = vmul.f32 %v655, 1.442695
    %v704 = vpow.pop %v703
    %v705 = vmul.f32 %v656, 1.442695
    %v706 = vpow.pop %v705
    %v707 = vmul.f32 %v657, 1.442695
    %v708 = vpow.pop %v707
    %v709 = vmul.f32 %v658, 1.442695
    %v710 = vpow.pop %v709
    %v711 = vmul.f32 %v659, 1.442695
    %v712 = vpow.pop %v711
    %v713 = vmul.f32 %v660, 1.442695
    %v714 = vpow.pop %v713
    %v715 = vmul.f32 %v661, 1.442695
    %v716 = vpow.pop %v715
    %v717 = vmul.f32 %v662, 1.442695
    %v718 = vpow.pop %v717
    %v719 = vmul.f32 %v663, 1.442695
    %v720 = vpow.pop %v719
    %v721 = vmul.f32 %v664, 1.442695
    %v722 = vpow.pop %v721
    %v723 = vmul.f32 %v665, 1.442695
    %v724 = vpow.pop %v723
    %v725 = vmul.f32 %v666, 1.442695
    %v726 = vpow.pop %v725
    %v727 = vmul.f32 %v667, 1.442695
    %v728 = vpow.pop %v727
    %v729 = vmul.f32 %v668, 1.442695
    %v730 = vpow.pop %v729
    %v731 = vmul.f32 %v669, 1.442695
    %v732 = vpow.pop %v731
    %v733 = vmul.f32 %v670, 1.442695
    %v734 = vpow.pop %v733
    %735 = vadd.xlane.f32.xlu0 %v672
    %v736 = vpop.xlane.xlu0 %735
    %737 = vadd.xlane.f32.xlu0 %v674
    %v738 = vpop.xlane.xlu0 %737
    %739 = vadd.xlane.f32.xlu0 %v676
    %v740 = vpop.xlane.xlu0 %739
    %741 = vadd.xlane.f32.xlu0 %v678
    %v742 = vpop.xlane.xlu0 %741
    %743 = vadd.xlane.f32.xlu0 %v680
    %v744 = vpop.xlane.xlu0 %743
    %745 = vadd.xlane.f32.xlu0 %v682
    %v746 = vpop.xlane.xlu0 %745
    %747 = vadd.xlane.f32.xlu0 %v684
    %v748 = vpop.xlane.xlu0 %747
    %749 = vadd.xlane.f32.xlu0 %v686
    %v750 = vpop.xlane.xlu0 %749
    %751 = vadd.xlane.f32.xlu0 %v688
    %v752 = vpop.xlane.xlu0 %751
    %753 = vadd.xlane.f32.xlu0 %v690
    %v754 = vpop.xlane.xlu0 %753
    %755 = vadd.xlane.f32.xlu0 %v692
    %v756 = vpop.xlane.xlu0 %755
    %757 = vadd.xlane.f32.xlu0 %v694
    %v758 = vpop.xlane.xlu0 %757
    %759 = vadd.xlane.f32.xlu0 %v696
    %v760 = vpop.xlane.xlu0 %759
    %761 = vadd.xlane.f32.xlu0 %v698
    %v762 = vpop.xlane.xlu0 %761
    %763 = vadd.xlane.f32.xlu0 %v700
    %v764 = vpop.xlane.xlu0 %763
    %765 = vadd.xlane.f32.xlu0 %v702
    %v766 = vpop.xlane.xlu0 %765
    %767 = vadd.xlane.f32.xlu0 %v704
    %v768 = vpop.xlane.xlu0 %767
    %769 = vadd.xlane.f32.xlu0 %v706
    %v770 = vpop.xlane.xlu0 %769
    %771 = vadd.xlane.f32.xlu0 %v708
    %v772 = vpop.xlane.xlu0 %771
    %773 = vadd.xlane.f32.xlu0 %v710
    %v774 = vpop.xlane.xlu0 %773
    %775 = vadd.xlane.f32.xlu0 %v712
    %v776 = vpop.xlane.xlu0 %775
    %777 = vadd.xlane.f32.xlu0 %v714
    %v778 = vpop.xlane.xlu0 %777
    %779 = vadd.xlane.f32.xlu0 %v716
    %v780 = vpop.xlane.xlu0 %779
    %781 = vadd.xlane.f32.xlu0 %v718
    %v782 = vpop.xlane.xlu0 %781
    %783 = vadd.xlane.f32.xlu0 %v720
    %v784 = vpop.xlane.xlu0 %783
    %785 = vadd.xlane.f32.xlu0 %v722
    %v786 = vpop.xlane.xlu0 %785
    %787 = vadd.xlane.f32.xlu0 %v724
    %v788 = vpop.xlane.xlu0 %787
    %789 = vadd.xlane.f32.xlu0 %v726
    %v790 = vpop.xlane.xlu0 %789
    %791 = vadd.xlane.f32.xlu0 %v728
    %v792 = vpop.xlane.xlu0 %791
    %793 = vadd.xlane.f32.xlu0 %v730
    %v794 = vpop.xlane.xlu0 %793
    %795 = vadd.xlane.f32.xlu0 %v732
    %v796 = vpop.xlane.xlu0 %795
    %797 = vadd.xlane.f32.xlu0 %v734
    %v798 = vpop.xlane.xlu0 %797
    %v799 = vrcp.pop %v736
    %v800 = vrcp.pop %v738
    %v801 = vrcp.pop %v740
    %v802 = vrcp.pop %v742
    %v803 = vrcp.pop %v744
    %v804 = vrcp.pop %v746
    %v805 = vrcp.pop %v748
    %v806 = vrcp.pop %v750
    %v807 = vrcp.pop %v752
    %v808 = vrcp.pop %v754
    %v809 = vrcp.pop %v756
    %v810 = vrcp.pop %v758
    %v811 = vrcp.pop %v760
    %v812 = vrcp.pop %v762
    %v813 = vrcp.pop %v764
    %v814 = vrcp.pop %v766
    %v815 = vrcp.pop %v768
    %v816 = vrcp.pop %v770
    %v817 = vrcp.pop %v772
    %v818 = vrcp.pop %v774
    %v819 = vrcp.pop %v776
    %v820 = vrcp.pop %v778
    %v821 = vrcp.pop %v780
    %v822 = vrcp.pop %v782
    %v823 = vrcp.pop %v784
    %v824 = vrcp.pop %v786
    %v825 = vrcp.pop %v788
    %v826 = vrcp.pop %v790
    %v827 = vrcp.pop %v792
    %v828 = vrcp.pop %v794
    %v829 = vrcp.pop %v796
    %v830 = vrcp.pop %v798
    %v831 = vmul.f32 %v672, %v799
    %v832 = vmul.f32 %v674, %v800
    %v833 = vmul.f32 %v676, %v801
    %v834 = vmul.f32 %v678, %v802
    %v835 = vmul.f32 %v680, %v803
    %v836 = vmul.f32 %v682, %v804
    %v837 = vmul.f32 %v684, %v805
    %v838 = vmul.f32 %v686, %v806
    %v839 = vmul.f32 %v688, %v807
    %v840 = vmul.f32 %v690, %v808
    %v841 = vmul.f32 %v692, %v809
    %v842 = vmul.f32 %v694, %v810
    %v843 = vmul.f32 %v696, %v811
    %v844 = vmul.f32 %v698, %v812
    %v845 = vmul.f32 %v700, %v813
    %v846 = vmul.f32 %v702, %v814
    %v847 = vmul.f32 %v704, %v815
    %v848 = vmul.f32 %v706, %v816
    %v849 = vmul.f32 %v708, %v817
    %v850 = vmul.f32 %v710, %v818
    %v851 = vmul.f32 %v712, %v819
    %v852 = vmul.f32 %v714, %v820
    %v853 = vmul.f32 %v716, %v821
    %v854 = vmul.f32 %v718, %v822
    %v855 = vmul.f32 %v720, %v823
    %v856 = vmul.f32 %v722, %v824
    %v857 = vmul.f32 %v724, %v825
    %v858 = vmul.f32 %v726, %v826
    %v859 = vmul.f32 %v728, %v827
    %v860 = vmul.f32 %v730, %v828
    %v861 = vmul.f32 %v732, %v829
    %v862 = vmul.f32 %v734, %v830
    %v863 = vld [vmem:[#allocation7] sm:$0xff]
    %v864 = vld [vmem:[#allocation7 + $0x8] sm:$0xff]
    %v865 = vld [vmem:[#allocation7 + $0x10] sm:$0xff]
    %v866 = vld [vmem:[#allocation7 + $0x18] sm:$0xff]
    %v867 = vld [vmem:[#allocation7 + $0x20] sm:$0xff]
    %v868 = vld [vmem:[#allocation7 + $0x28] sm:$0xff]
    %v869 = vld [vmem:[#allocation7 + $0x30] sm:$0xff]
    %v870 = vld [vmem:[#allocation7 + $0x38] sm:$0xff]
    %v871 = vld [vmem:[#allocation7 + $0x40] sm:$0xff]
    %v872 = vld [vmem:[#allocation7 + $0x48] sm:$0xff]
    %v873 = vld [vmem:[#allocation7 + $0x50] sm:$0xff]
    %v874 = vld [vmem:[#allocation7 + $0x58] sm:$0xff]
    %v875 = vld [vmem:[#allocation7 + $0x60] sm:$0xff]
    %v876 = vld [vmem:[#allocation7 + $0x68] sm:$0xff]
    %v877 = vld [vmem:[#allocation7 + $0x70] sm:$0xff]
    %v878 = vld [vmem:[#allocation7 + $0x78] sm:$0xff]
    %v879 = vld [vmem:[#allocation7 + $0x80] sm:$0xff]
    %v880 = vld [vmem:[#allocation7 + $0x88] sm:$0xff]
    %v881 = vld [vmem:[#allocation7 + $0x90] sm:$0xff]
    %v882 = vld [vmem:[#allocation7 + $0x98] sm:$0xff]
    %v883 = vld [vmem:[#allocation7 + $0xa0] sm:$0xff]
    %v884 = vld [vmem:[#allocation7 + $0xa8] sm:$0xff]
    %v885 = vld [vmem:[#allocation7 + $0xb0] sm:$0xff]
    %v886 = vld [vmem:[#allocation7 + $0xb8] sm:$0xff]
    %v887 = vld [vmem:[#allocation7 + $0xc0] sm:$0xff]
    %v888 = vld [vmem:[#allocation7 + $0xc8] sm:$0xff]
    %v889 = vld [vmem:[#allocation7 + $0xd0] sm:$0xff]
    %v890 = vld [vmem:[#allocation7 + $0xd8] sm:$0xff]
    %v891 = vld [vmem:[#allocation7 + $0xe0] sm:$0xff]
    %v892 = vld [vmem:[#allocation7 + $0xe8] sm:$0xff]
    %v893 = vld [vmem:[#allocation7 + $0xf0] sm:$0xff]
    %v894 = vld [vmem:[#allocation7 + $0xf8] sm:$0xff]
    %v895 = vpack.c.bf16 %v832, %v831
    %v896 = vpack.c.bf16 %v834, %v833
    %v897 = vpack.c.bf16 %v836, %v835
    %v898 = vpack.c.bf16 %v838, %v837
    %v899 = vpack.c.bf16 %v840, %v839
    %v900 = vpack.c.bf16 %v842, %v841
    %v901 = vpack.c.bf16 %v844, %v843
    %v902 = vpack.c.bf16 %v846, %v845
    %v903 = vpack.c.bf16 %v848, %v847
    %v904 = vpack.c.bf16 %v850, %v849
    %v905 = vpack.c.bf16 %v852, %v851
    %v906 = vpack.c.bf16 %v854, %v853
    %v907 = vpack.c.bf16 %v856, %v855
    %v908 = vpack.c.bf16 %v858, %v857
    %v909 = vpack.c.bf16 %v860, %v859
    %v910 = vpack.c.bf16 %v862, %v861
    %911 = vxpose.xlu0.c.b16.start [1/8] %v895, 128
    %912 = vxpose.xlu0.c.b16.cont [2/8] %v896, 128
    %913 = vxpose.xlu0.c.b16.cont [3/8] %v897, 128
    %914 = vxpose.xlu0.c.b16.cont [4/8] %v898, 128
    %915 = vxpose.xlu0.c.b16.cont [5/8] %v899, 128
    %916 = vxpose.xlu0.c.b16.cont [6/8] %v900, 128
    %917 = vxpose.xlu0.c.b16.cont [7/8] %v901, 128
    %918 = vxpose.xlu0.c.b16.end [8/8] %v902, 128
    %v919 = vpop.trf.xlu0
    %v920 = vpop.trf.xlu0
    %v921 = vpop.trf.xlu0
    %v922 = vpop.trf.xlu0
    %v923 = vpop.trf.xlu0
    %v924 = vpop.trf.xlu0
    %v925 = vpop.trf.xlu0
    %v926 = vpop.trf.xlu0
    %927 = vxpose.xlu0.c.b16.start [1/8] %v903, 128
    %928 = vxpose.xlu0.c.b16.cont [2/8] %v904, 128
    %929 = vxpose.xlu0.c.b16.cont [3/8] %v905, 128
    %930 = vxpose.xlu0.c.b16.cont [4/8] %v906, 128
    %931 = vxpose.xlu0.c.b16.cont [5/8] %v907, 128
    %932 = vxpose.xlu0.c.b16.cont [6/8] %v908, 128
    %933 = vxpose.xlu0.c.b16.cont [7/8] %v909, 128
    %934 = vxpose.xlu0.c.b16.end [8/8] %v910, 128
    %v935 = vpop.trf.xlu0
    %v936 = vpop.trf.xlu0
    %v937 = vpop.trf.xlu0
    %v938 = vpop.trf.xlu0
    %v939 = vpop.trf.xlu0
    %v940 = vpop.trf.xlu0
    %v941 = vpop.trf.xlu0
    %v942 = vpop.trf.xlu0
    %943 = vmatprep.subr.bf16.mxu0 %v269
    %944 = vmatpush1.bf16.msra.mxu0 %v268
    %945 = vmatprep.subr.bf16.mxu0 %v267
    %946 = vmatpush1.bf16.msra.mxu0 %v266
    %947 = vmatprep.subr.bf16.mxu0 %v265
    %948 = vmatpush1.bf16.msra.mxu0 %v264
    %949 = vmatprep.subr.bf16.mxu0 %v263
    %950 = vmatpush1.bf16.msra.mxu0 %v262
    %951 = vmatprep.subr.bf16.mxu0 %v261
    %952 = vmatpush1.bf16.msra.mxu0 %v260
    %953 = vmatprep.subr.bf16.mxu0 %v259
    %954 = vmatpush1.bf16.msra.mxu0 %v258
    %955 = vmatprep.subr.bf16.mxu0 %v257
    %956 = vmatpush1.bf16.msra.mxu0 %v256
    %957 = vmatprep.subr.bf16.mxu0 %v255
    %958 = vmatpush1.bf16.msra.mxu0 %v254
    %959 = vmatprep.subr.bf16.mxu0 %v285
    %960 = vmatpush2.bf16.msra.mxu0 %v284
    %961 = vmatprep.subr.bf16.mxu0 %v283
    %962 = vmatpush2.bf16.msra.mxu0 %v282
    %963 = vmatprep.subr.bf16.mxu0 %v281
    %964 = vmatpush2.bf16.msra.mxu0 %v280
    %965 = vmatprep.subr.bf16.mxu0 %v279
    %966 = vmatpush2.bf16.msra.mxu0 %v278
    %967 = vmatprep.subr.bf16.mxu0 %v277
    %968 = vmatpush2.bf16.msra.mxu0 %v276
    %969 = vmatprep.subr.bf16.mxu0 %v275
    %970 = vmatpush2.bf16.msra.mxu0 %v274
    %971 = vmatprep.subr.bf16.mxu0 %v273
    %972 = vmatpush2.bf16.msra.mxu0 %v272
    %973 = vmatprep.subr.bf16.mxu0 %v271
    %974 = vmatpush2.bf16.msra.mxu0 %v270
    %975 = vmatprep.mubr.bf16.mxu0 %v935
    %976 = vmatmul.mubr.bf16.gmra.mxu0 %v919
    %v977 = vpop.f32.mrf.mxu0
    %v978 = vadd.f32 0.0, %v977
    %v979 = vpop.f32.mrf.mxu0
    %v980 = vadd.f32 0.0, %v979
    %v981 = vpop.f32.mrf.mxu0
    %v982 = vadd.f32 0.0, %v981
    %v983 = vpop.f32.mrf.mxu0
    %v984 = vadd.f32 0.0, %v983
    %985 = vmatprep.mubr.bf16.mxu0 %v936
    %986 = vmatmul.mubr.bf16.gmra.mxu0 %v920
    %v987 = vpop.f32.mrf.mxu0
    %v988 = vadd.f32 0.0, %v987
    %v989 = vpop.f32.mrf.mxu0
    %v990 = vadd.f32 0.0, %v989
    %v991 = vpop.f32.mrf.mxu0
    %v992 = vadd.f32 0.0, %v991
    %v993 = vpop.f32.mrf.mxu0
    %v994 = vadd.f32 0.0, %v993
    %995 = vmatprep.mubr.bf16.mxu0 %v937
    %996 = vmatmul.mubr.bf16.gmra.mxu0 %v921
    %v997 = vpop.f32.mrf.mxu0
    %v998 = vadd.f32 0.0, %v997
    %v999 = vpop.f32.mrf.mxu0
    %v1000 = vadd.f32 0.0, %v999
    %v1001 = vpop.f32.mrf.mxu0
    %v1002 = vadd.f32 0.0, %v1001
    %v1003 = vpop.f32.mrf.mxu0
    %v1004 = vadd.f32 0.0, %v1003
    %1005 = vmatprep.mubr.bf16.mxu0 %v938
    %1006 = vmatmul.mubr.bf16.gmra.mxu0 %v922
    %v1007 = vpop.f32.mrf.mxu0
    %v1008 = vadd.f32 0.0, %v1007
    %v1009 = vpop.f32.mrf.mxu0
    %v1010 = vadd.f32 0.0, %v1009
    %v1011 = vpop.f32.mrf.mxu0
    %v1012 = vadd.f32 0.0, %v1011
    %v1013 = vpop.f32.mrf.mxu0
    %v1014 = vadd.f32 0.0, %v1013
    %1015 = vmatprep.mubr.bf16.mxu0 %v939
    %1016 = vmatmul.mubr.bf16.gmra.mxu0 %v923
    %v1017 = vpop.f32.mrf.mxu0
    %v1018 = vadd.f32 0.0, %v1017
    %v1019 = vpop.f32.mrf.mxu0
    %v1020 = vadd.f32 0.0, %v1019
    %v1021 = vpop.f32.mrf.mxu0
    %v1022 = vadd.f32 0.0, %v1021
    %v1023 = vpop.f32.mrf.mxu0
    %v1024 = vadd.f32 0.0, %v1023
    %1025 = vmatprep.mubr.bf16.mxu0 %v940
    %1026 = vmatmul.mubr.bf16.gmra.mxu0 %v924
    %v1027 = vpop.f32.mrf.mxu0
    %v1028 = vadd.f32 0.0, %v1027
    %v1029 = vpop.f32.mrf.mxu0
    %v1030 = vadd.f32 0.0, %v1029
    %v1031 = vpop.f32.mrf.mxu0
    %v1032 = vadd.f32 0.0, %v1031
    %v1033 = vpop.f32.mrf.mxu0
    %v1034 = vadd.f32 0.0, %v1033
    %1035 = vmatprep.mubr.bf16.mxu0 %v941
    %1036 = vmatmul.mubr.bf16.gmra.mxu0 %v925
    %v1037 = vpop.f32.mrf.mxu0
    %v1038 = vadd.f32 0.0, %v1037
    %v1039 = vpop.f32.mrf.mxu0
    %v1040 = vadd.f32 0.0, %v1039
    %v1041 = vpop.f32.mrf.mxu0
    %v1042 = vadd.f32 0.0, %v1041
    %v1043 = vpop.f32.mrf.mxu0
    %v1044 = vadd.f32 0.0, %v1043
    %1045 = vmatprep.mubr.bf16.mxu0 %v942
    %1046 = vmatmul.mubr.bf16.gmra.mxu0 %v926
    %v1047 = vpop.f32.mrf.mxu0
    %v1048 = vadd.f32 0.0, %v1047
    %v1049 = vpop.f32.mrf.mxu0
    %v1050 = vadd.f32 0.0, %v1049
    %v1051 = vpop.f32.mrf.mxu0
    %v1052 = vadd.f32 0.0, %v1051
    %v1053 = vpop.f32.mrf.mxu0
    %v1054 = vadd.f32 0.0, %v1053
    %1055 = vdwg.mxu0
    %v1056 = vadd.f32 %v863, %v978
    %v1057 = vadd.f32 %v864, %v980
    %v1058 = vadd.f32 %v865, %v982
    %v1059 = vadd.f32 %v866, %v984
    %v1060 = vadd.f32 %v867, %v988
    %v1061 = vadd.f32 %v868, %v990
    %v1062 = vadd.f32 %v869, %v992
    %v1063 = vadd.f32 %v870, %v994
    %v1064 = vadd.f32 %v871, %v998
    %v1065 = vadd.f32 %v872, %v1000
    %v1066 = vadd.f32 %v873, %v1002
    %v1067 = vadd.f32 %v874, %v1004
    %v1068 = vadd.f32 %v875, %v1008
    %v1069 = vadd.f32 %v876, %v1010
    %v1070 = vadd.f32 %v877, %v1012
    %v1071 = vadd.f32 %v878, %v1014
    %v1072 = vadd.f32 %v879, %v1018
    %v1073 = vadd.f32 %v880, %v1020
    %v1074 = vadd.f32 %v881, %v1022
    %v1075 = vadd.f32 %v882, %v1024
    %v1076 = vadd.f32 %v883, %v1028
    %v1077 = vadd.f32 %v884, %v1030
    %v1078 = vadd.f32 %v885, %v1032
    %v1079 = vadd.f32 %v886, %v1034
    %v1080 = vadd.f32 %v887, %v1038
    %v1081 = vadd.f32 %v888, %v1040
    %v1082 = vadd.f32 %v889, %v1042
    %v1083 = vadd.f32 %v890, %v1044
    %v1084 = vadd.f32 %v891, %v1048
    %v1085 = vadd.f32 %v892, %v1050
    %v1086 = vadd.f32 %v893, %v1052
    %v1087 = vadd.f32 %v894, %v1054
    %1088 = vst [vmem:[#allocation7] sm:$0xff] %v1056
    %1089 = vst [vmem:[#allocation7 + $0x8] sm:$0xff] %v1057
    %1090 = vst [vmem:[#allocation7 + $0x10] sm:$0xff] %v1058
    %1091 = vst [vmem:[#allocation7 + $0x18] sm:$0xff] %v1059
    %1092 = vst [vmem:[#allocation7 + $0x20] sm:$0xff] %v1060
    %1093 = vst [vmem:[#allocation7 + $0x28] sm:$0xff] %v1061
    %1094 = vst [vmem:[#allocation7 + $0x30] sm:$0xff] %v1062
    %1095 = vst [vmem:[#allocation7 + $0x38] sm:$0xff] %v1063
    %1096 = vst [vmem:[#allocation7 + $0x40] sm:$0xff] %v1064
    %1097 = vst [vmem:[#allocation7 + $0x48] sm:$0xff] %v1065
    %1098 = vst [vmem:[#allocation7 + $0x50] sm:$0xff] %v1066
    %1099 = vst [vmem:[#allocation7 + $0x58] sm:$0xff] %v1067
    %1100 = vst [vmem:[#allocation7 + $0x60] sm:$0xff] %v1068
    %1101 = vst [vmem:[#allocation7 + $0x68] sm:$0xff] %v1069
    %1102 = vst [vmem:[#allocation7 + $0x70] sm:$0xff] %v1070
    %1103 = vst [vmem:[#allocation7 + $0x78] sm:$0xff] %v1071
    %1104 = vst [vmem:[#allocation7 + $0x80] sm:$0xff] %v1072
    %1105 = vst [vmem:[#allocation7 + $0x88] sm:$0xff] %v1073
    %1106 = vst [vmem:[#allocation7 + $0x90] sm:$0xff] %v1074
    %1107 = vst [vmem:[#allocation7 + $0x98] sm:$0xff] %v1075
    %1108 = vst [vmem:[#allocation7 + $0xa0] sm:$0xff] %v1076
    %1109 = vst [vmem:[#allocation7 + $0xa8] sm:$0xff] %v1077
    %1110 = vst [vmem:[#allocation7 + $0xb0] sm:$0xff] %v1078
    %1111 = vst [vmem:[#allocation7 + $0xb8] sm:$0xff] %v1079
    %1112 = vst [vmem:[#allocation7 + $0xc0] sm:$0xff] %v1080
    %1113 = vst [vmem:[#allocation7 + $0xc8] sm:$0xff] %v1081
    %1114 = vst [vmem:[#allocation7 + $0xd0] sm:$0xff] %v1082
    %1115 = vst [vmem:[#allocation7 + $0xd8] sm:$0xff] %v1083
    %1116 = vst [vmem:[#allocation7 + $0xe0] sm:$0xff] %v1084
    %1117 = vst [vmem:[#allocation7 + $0xe8] sm:$0xff] %v1085
    %1118 = vst [vmem:[#allocation7 + $0xf0] sm:$0xff] %v1086
    %1119 = vst [vmem:[#allocation7 + $0xf8] sm:$0xff] %v1087
    // Predicated region
    $region26: #{tpu_custom_call.1} parent=1 // pred_check
      _
    $region27: #{tpu_custom_call.1} parent=1 // pred_check_branch
      %1121 = sbr.rel (0) target = $region29
    $region28: #{tpu_custom_call.1} parent=1 // pred_region
      %s1123 = ssub.s32 4096, 4096
      %1124 = vsyncadd [#allocation4], %s1123
      %s1125 = sshll.u32 [#allocation7], 4
      %s1126 = int_to_ptr.vmem [resolvable:$true] %s1125
      %1131 = dma.vmem_to_hbm [thread:$0]  %s1126, 4096, %s3, [#allocation4], 256, 256, 16
    $region29: #{tpu_custom_call.1} parent=1 // pred_fallthru
      _
    // Predicated region
    $region30: #{tpu_custom_call.1} parent=1 // pred_check
      _
    $region31: #{tpu_custom_call.1} parent=1 // pred_check_branch
      %1133 = sbr.rel (0) target = $region33
    $region32: #{tpu_custom_call.1} parent=1 // pred_region
      %1134 = dma.done [#allocation4], 4096
    $region33: #{tpu_custom_call.1} parent=1 // pred_fallthru
      _
    %1135 = vsyncpa [#allocation3], 1
    %1136 = vsyncpa [#allocation6], 1
    %1137 = vsyncpa [#allocation4], 1

</llo_original>
